<compile_context>
chip_gen: v7x
topology: tpu7x:2x2x1
jax: 0.10.0
libtpu: 0.0.40
codegen_flags: <defaults>
</compile_context>

<pallas_src>
import functools

import jax
import jax.numpy as jnp
from jax import lax
from jax.experimental import pallas as pl
from jax.experimental.pallas import tpu as pltpu

NUM_CLASSES = 3
FEAT_C = 1280          # EfficientNet-B0 feature channels
HIDDEN = 512
OUT_DIM = NUM_CLASSES * 5
PATCH = 32             # EfficientNet-B0 overall stride
MAX_THW = 2048         # HW tile rows: 2 bf16 buffers x 5.24 MB ~= 10.5 MB VMEM
                       # (+ ~1.5 MB bf16 weights) -> fits v5e's 16 MiB scoped
                       # default with no flag changes; big enough to amortize
                       # the ~0.35 us per-grid-step overhead on v7x.


# ---------------------------------------------------------------------------
# Pallas kernel: det_head = global-avg-pool + Linear + ReLU + Linear
# ---------------------------------------------------------------------------
def det_head_kernel(inv_hw, rows_last, has_tail,
                    f_ref, w1_ref, b1_ref, w2_ref, b2_ref, o_ref, acc_ref):
    # f_ref: (1, THW, C) bf16 tile of features for the current batch element.
    k = pl.program_id(1)
    thw = f_ref.shape[1]

    @pl.when(k == 0)
    def _():
        acc_ref[...] = jnp.zeros_like(acc_ref)

    f = f_ref[0]                                                   # (THW, C) bf16
    if has_tail:  # static: HW % THW != 0
        # Pallas does NOT zero-fill partial blocks: rows past the true HW in
        # the last tile are unspecified VMEM, so zero them before the reduce.
        # (All-true mask on non-tail tiles; one bf16 select pass, hidden under
        # the tile DMA.)
        valid = jnp.where(k == pl.num_programs(1) - 1, rows_last, thw)
        row_ids = lax.broadcasted_iota(jnp.int32, (thw, 1), 0)
        f = jnp.where(row_ids < valid, f, jnp.zeros_like(f))

    # Partial spatial sum on the MXU (ones-row matvec) with f32 accumulation.
    # Keeps the VPU cast+add-tree off the critical path on v7x.
    ones_row = jnp.ones((1, thw), dtype=f.dtype)
    acc_ref[...] += jnp.dot(ones_row, f, preferred_element_type=jnp.float32)

    @pl.when(k == pl.num_programs(1) - 1)
    def _():
        pooled = acc_ref[...] * inv_hw                             # AdaptiveAvgPool2d(1)+Flatten
        h = jnp.dot(pooled.astype(w1_ref.dtype), w1_ref[...],
                    preferred_element_type=jnp.float32) + b1_ref[...]   # Linear(1280, 512)
        h = jnp.maximum(h, 0.0)                                    # ReLU
        out = jnp.dot(h.astype(w2_ref.dtype), w2_ref[...],
                      preferred_element_type=jnp.float32) + b2_ref[...]  # Linear(512, 15)
        o_ref[...] = out.reshape(o_ref.shape).astype(o_ref.dtype)


def det_head_pallas(features_nhwc, w1_t, b1, w2_t, b2, *, max_thw=MAX_THW):
    """features_nhwc: (B, Hf, Wf, C), ideally already bf16 from the producer.

    Weights are expected transposed to (in, out); w1_t/w2_t in bf16, biases f32.
    """
    B, Hf, Wf, C = features_nhwc.shape
    HW = Hf * Wf
    f = features_nhwc.reshape(B, HW, C)            # free reshape, no transpose
    if f.dtype != jnp.bfloat16:
        # Fallback only: callers should emit bf16 from the backbone epilogue so
        # this convert fuses there instead of costing a standalone HBM pass.
        f = f.astype(jnp.bfloat16)

    # HW tile selection: full extent if it fits, else the largest multiple of 16
    # (bf16 sublane packing) up to max_thw. No jnp.pad: tail tile is masked
    # inside the kernel.
    if HW <= max_thw:
        thw = HW
    else:
        thw = max(16, (max_thw // 16) * 16)
    num_k = pl.cdiv(HW, thw)
    rem = HW % thw
    has_tail = rem != 0
    rows_last = rem if has_tail else thw

    out = pl.pallas_call(
        functools.partial(det_head_kernel, 1.0 / HW, rows_last, has_tail),
        out_shape=jax.ShapeDtypeStruct((B, 1, OUT_DIM), jnp.float32),
        grid_spec=pltpu.PrefetchScalarGridSpec(
            num_scalar_prefetch=0,
            grid=(B, num_k),
            in_specs=[
                # Streamed feature tiles (double-buffered by default).
                pl.BlockSpec((1, thw, C), lambda b, k: (b, k, 0)),
                # Resident weights/biases: bf16 + single-buffered -> frees VMEM
                # for larger feature tiles on v5e/v7x scoped defaults.
                pl.BlockSpec(w1_t.shape, lambda b, k: (0, 0),
                             pipeline_mode=pl.Buffered(1)),
                pl.BlockSpec(b1.shape, lambda b, k: (0, 0),
                             pipeline_mode=pl.Buffered(1)),
                pl.BlockSpec(w2_t.shape, lambda b, k: (0, 0),
                             pipeline_mode=pl.Buffered(1)),
                pl.BlockSpec(b2.shape, lambda b, k: (0, 0),
                             pipeline_mode=pl.Buffered(1)),
            ],
            out_specs=pl.BlockSpec((1, 1, OUT_DIM), lambda b, k: (b, 0, 0)),
            scratch_shapes=[pltpu.VMEM((1, FEAT_C), jnp.float32)],  # f32 pooling acc
        ),
        compiler_params=pltpu.CompilerParams(
            dimension_semantics=("parallel", "arbitrary")),
    )(f, w1_t, b1, w2_t, b2)
    return out.reshape(B, OUT_DIM)


# ---------------------------------------------------------------------------
# Backbone stand-in (plain-JAX glue), emitting bf16 NHWC directly so the
# convert fuses into the backbone epilogue (no standalone HBM cast pass).
# TODO(synk): the pretrained torchvision EfficientNet-B0 feature extractor
# (MBConv blocks / SE / BN / SiLU with checkpoint weights) is not reimplemented;
# this deterministic stand-in reproduces only its shape contract
# (B, 3, H, W) -> (B, H/32, W/32, 1280) via a stride-32 patch embedding.
# ---------------------------------------------------------------------------
def backbone_stub(x_nchw, wp, out_dtype=jnp.bfloat16):
    B, C, H, W = x_nchw.shape
    Hf, Wf = H // PATCH, W // PATCH
    patches = (x_nchw
               .reshape(B, C, Hf, PATCH, Wf, PATCH)
               .transpose(0, 2, 4, 1, 3, 5)
               .reshape(B, Hf, Wf, C * PATCH * PATCH))
    feats = jnp.dot(patches, wp, preferred_element_type=jnp.float32)
    return feats.astype(out_dtype)                 # fuses into the GEMM epilogue


# ---------------------------------------------------------------------------
# Full forward (matches CustomDetector.forward)
# ---------------------------------------------------------------------------
@jax.jit
def custom_detector_forward(x, params):
    features = backbone_stub(x, params["wp"])               # bf16 NHWC, no NCHW round-trip
    det = det_head_pallas(features, params["w1_t"], params["b1"],
                          params["w2_t"], params["b2"])
    return det.reshape(x.shape[0], -1, 5)                   # .view(B, -1, 5)


def init_params(key):
    kp, k1, k2 = jax.random.split(key, 3)
    # kaiming_normal_ (fan_in, gain=sqrt(2)) for Linear weights, bias = 0.
    w1 = jax.random.normal(k1, (HIDDEN, FEAT_C), jnp.float32) * jnp.sqrt(2.0 / FEAT_C)   # (out, in)
    w2 = jax.random.normal(k2, (OUT_DIM, HIDDEN), jnp.float32) * jnp.sqrt(2.0 / HIDDEN)  # (out, in)
    wp = jax.random.normal(kp, (3 * PATCH * PATCH, FEAT_C), jnp.float32) * 0.02          # backbone stub
    return {
        "wp": wp,
        "w1_t": jnp.transpose(w1).astype(jnp.bfloat16),     # (1280, 512) bf16, kernel-friendly
        "b1": jnp.zeros((1, HIDDEN), jnp.float32),
        "w2_t": jnp.transpose(w2).astype(jnp.bfloat16),     # (512, 15) bf16
        "b2": jnp.zeros((1, OUT_DIM), jnp.float32),
    }


def ref_head(feats, params):
    """Pure-JAX reference mirroring the kernel numerics (bf16 stream, f32 acc)."""
    B = feats.shape[0]
    fb = feats.astype(jnp.bfloat16).astype(jnp.float32)
    pooled = jnp.mean(fb.reshape(B, -1, FEAT_C), axis=1)
    w1 = params["w1_t"].astype(jnp.float32)
    w2 = params["w2_t"].astype(jnp.float32)
    h = jnp.maximum(pooled.astype(jnp.bfloat16).astype(jnp.float32) @ w1 + params["b1"], 0.0)
    return h.astype(jnp.bfloat16).astype(jnp.float32) @ w2 + params["b2"]


if __name__ == "__main__":
    key = jax.random.PRNGKey(0)
    kx, kparams, kf = jax.random.split(key, 3)
    params = init_params(kparams)

    # --- Case 1: full forward at small shapes --------------------------------
    # NCHW image (2, 3, 64, 64) -> backbone features (2, 2, 2, 1280) bf16 NHWC
    # -> detections (2, 3, 5). Single HW tile (HW = 4), no tail.
    x = jax.random.normal(kx, (2, 3, 64, 64), jnp.float32)
    out = jax.block_until_ready(custom_detector_forward(x, params))
    assert out.shape == (2, NUM_CLASSES, 5), out.shape
    assert jnp.all(jnp.isfinite(out))

    feats = backbone_stub(x, params["wp"])
    ref = ref_head(feats, params).reshape(2, -1, 5)
    assert jnp.allclose(out, ref, atol=2e-2, rtol=2e-2), float(jnp.max(jnp.abs(out - ref)))

    # --- Case 2: multi-tile accumulator + masked tail tile -------------------
    # HW = 48 tiled at 32 -> 2 HW tiles, last tile has 16 valid rows (mask path).
    feats2 = jax.random.normal(kf, (2, 6, 8, FEAT_C), jnp.float32)
    ref2 = ref_head(feats2, params)
    out2 = jax.block_until_ready(
        det_head_pallas(feats2, params["w1_t"], params["b1"],
                        params["w2_t"], params["b2"], max_thw=32))
    assert jnp.allclose(out2, ref2, atol=2e-2, rtol=2e-2), float(jnp.max(jnp.abs(out2 - ref2)))

    # --- Case 3: multi-tile, evenly divisible (no tail, no mask) -------------
    # HW = 48 tiled at 16 -> 3 full HW tiles.
    out3 = jax.block_until_ready(
        det_head_pallas(feats2, params["w1_t"], params["b1"],
                        params["w2_t"], params["b2"], max_thw=16))
    assert jnp.allclose(out3, ref2, atol=2e-2, rtol=2e-2), float(jnp.max(jnp.abs(out3 - ref2)))

    print("KERNEL_OK")
</pallas_src>

<mosaic_0001>
module attributes {stable_mosaic.version = 11 : i64} {
  func.func @det_head_kernel(%arg0: i32, %arg1: i32, %arg2: memref<1x4x1280xbf16, #tpu.memory_space<vmem>>, %arg3: memref<1280x512xbf16, #tpu.memory_space<vmem>>, %arg4: memref<1x512xf32, #tpu.memory_space<vmem>>, %arg5: memref<512x15xbf16, #tpu.memory_space<vmem>>, %arg6: memref<1x15xf32, #tpu.memory_space<vmem>>, %arg7: memref<1x1x15xf32, #tpu.memory_space<vmem>>, %arg8: memref<1x1280xf32, #tpu.memory_space<vmem>>) attributes {dimension_semantics = [#tpu.dimension_semantics<parallel>, #tpu.dimension_semantics<arbitrary>], iteration_bounds = array<i64: 2, 1>, scalar_prefetch = 0 : i64, scratch_operands = 1 : i64, tpu.core_type = #tpu.core_type<tc>, window_params = [{transform_indices = @transform_0, window_bounds = array<i64: 1, 4, 1280>}, {pipeline_mode = #tpu.pipeline_mode<synchronous>, transform_indices = @transform_1, window_bounds = array<i64: 1280, 512>}, {pipeline_mode = #tpu.pipeline_mode<synchronous>, transform_indices = @transform_2, window_bounds = array<i64: 1, 512>}, {pipeline_mode = #tpu.pipeline_mode<synchronous>, transform_indices = @transform_3, window_bounds = array<i64: 512, 15>}, {pipeline_mode = #tpu.pipeline_mode<synchronous>, transform_indices = @transform_4, window_bounds = array<i64: 1, 15>}, {transform_indices = @transform_5, window_bounds = array<i64: 1, 1, 15>}]} {
    %c0_i32 = arith.constant 0 : i32
    %0 = arith.cmpi eq, %arg1, %c0_i32 : i32
    %1 = arith.extui %0 : i1 to i32
    %c0_i32_0 = arith.constant 0 : i32
    %2 = arith.cmpi ne, %1, %c0_i32_0 : i32
    scf.if %2 {
      %cst_10 = arith.constant 0.000000e+00 : f32
      %13 = vector.broadcast %cst_10 : f32 to vector<1x1280xf32>
      %c0_11 = arith.constant 0 : index
      %c0_12 = arith.constant 0 : index
      %14 = vector.load %arg8[%c0_11, %c0_12] : memref<1x1280xf32, #tpu.memory_space<vmem>>, vector<1x1280xf32>
      tpu.vector_store %arg8[%c0_11, %c0_12], %13 {strides = array<i32>} : memref<1x1280xf32, #tpu.memory_space<vmem>>, vector<1x1280xf32>,
    } else {
    }
    %c0 = arith.constant 0 : index
    %c0_1 = arith.constant 0 : index
    %c0_2 = arith.constant 0 : index
    %3 = vector.load %arg2[%c0, %c0_1, %c0_2] : memref<1x4x1280xbf16, #tpu.memory_space<vmem>>, vector<1x4x1280xbf16>
    %4 = vector.shape_cast %3 : vector<1x4x1280xbf16> to vector<4x1280xbf16>
    %cst = arith.constant 1.000000e+00 : bf16
    %5 = vector.broadcast %cst : bf16 to vector<1x4xbf16>
    %c0_3 = arith.constant 0 : index
    %c0_4 = arith.constant 0 : index
    %6 = vector.load %arg8[%c0_3, %c0_4] : memref<1x1280xf32, #tpu.memory_space<vmem>>, vector<1x1280xf32>
    %cst_5 = arith.constant dense<0.000000e+00> : vector<1x1280xf32>
    %7 = tpu.matmul %5, %4, %cst_5 {dimension_numbers = #tpu.dot_dimension_numbers<[1], [0], [0], [1], [0, 0, 1, 1], [], []>} : vector<1x4xbf16>, vector<4x1280xbf16>, vector<1x1280xf32> -> vector<1x1280xf32>
    %8 = arith.addf %6, %7 : vector<1x1280xf32>
    %c0_6 = arith.constant 0 : index
    %c0_7 = arith.constant 0 : index
    %9 = vector.load %arg8[%c0_6, %c0_7] : memref<1x1280xf32, #tpu.memory_space<vmem>>, vector<1x1280xf32>
    tpu.vector_store %arg8[%c0_6, %c0_7], %8 {strides = array<i32>} : memref<1x1280xf32, #tpu.memory_space<vmem>>, vector<1x1280xf32>,
    %c0_i32_8 = arith.constant 0 : i32
    %10 = arith.cmpi eq, %arg1, %c0_i32_8 : i32
    %11 = arith.extui %10 : i1 to i32
    %c0_i32_9 = arith.constant 0 : i32
    %12 = arith.cmpi ne, %11, %c0_i32_9 : i32
    scf.if %12 {
      %c0_10 = arith.constant 0 : index
      %c0_11 = arith.constant 0 : index
      %13 = vector.load %arg8[%c0_10, %c0_11] : memref<1x1280xf32, #tpu.memory_space<vmem>>, vector<1x1280xf32>
      %cst_12 = arith.constant 2.500000e-01 : f32
      %14 = vector.broadcast %cst_12 : f32 to vector<1x1280xf32>
      %15 = arith.mulf %13, %14 : vector<1x1280xf32>
      %16 = arith.truncf %15 : vector<1x1280xf32> to vector<1x1280xbf16>
      %c0_13 = arith.constant 0 : index
      %c0_14 = arith.constant 0 : index
      %17 = vector.load %arg3[%c0_13, %c0_14] : memref<1280x512xbf16, #tpu.memory_space<vmem>>, vector<1280x512xbf16>
      %cst_15 = arith.constant dense<0.000000e+00> : vector<1x512xf32>
      %18 = tpu.matmul %16, %17, %cst_15 {dimension_numbers = #tpu.dot_dimension_numbers<[1], [0], [0], [1], [0, 0, 1, 1], [], []>} : vector<1x1280xbf16>, vector<1280x512xbf16>, vector<1x512xf32> -> vector<1x512xf32>
      %c0_16 = arith.constant 0 : index
      %c0_17 = arith.constant 0 : index
      %19 = vector.load %arg4[%c0_16, %c0_17] : memref<1x512xf32, #tpu.memory_space<vmem>>, vector<1x512xf32>
      %20 = arith.addf %18, %19 : vector<1x512xf32>
      %cst_18 = arith.constant 0.000000e+00 : f32
      %21 = vector.broadcast %cst_18 : f32 to vector<1x512xf32>
      %22 = arith.maximumf %20, %21 : vector<1x512xf32>
      %23 = arith.truncf %22 : vector<1x512xf32> to vector<1x512xbf16>
      %c0_19 = arith.constant 0 : index
      %c0_20 = arith.constant 0 : index
      %24 = vector.load %arg5[%c0_19, %c0_20] : memref<512x15xbf16, #tpu.memory_space<vmem>>, vector<512x15xbf16>
      %cst_21 = arith.constant dense<0.000000e+00> : vector<1x15xf32>
      %25 = tpu.matmul %23, %24, %cst_21 {dimension_numbers = #tpu.dot_dimension_numbers<[1], [0], [0], [1], [0, 0, 1, 1], [], []>} : vector<1x512xbf16>, vector<512x15xbf16>, vector<1x15xf32> -> vector<1x15xf32>
      %c0_22 = arith.constant 0 : index
      %c0_23 = arith.constant 0 : index
      %26 = vector.load %arg6[%c0_22, %c0_23] : memref<1x15xf32, #tpu.memory_space<vmem>>, vector<1x15xf32>
      %27 = arith.addf %25, %26 : vector<1x15xf32>
      %28 = vector.shape_cast %27 : vector<1x15xf32> to vector<1x1x15xf32>
      %c0_24 = arith.constant 0 : index
      %c0_25 = arith.constant 0 : index
      %c0_26 = arith.constant 0 : index
      %29 = vector.load %arg7[%c0_24, %c0_25, %c0_26] : memref<1x1x15xf32, #tpu.memory_space<vmem>>, vector<1x1x15xf32>
      tpu.vector_store %arg7[%c0_24, %c0_25, %c0_26], %28 {strides = array<i32>} : memref<1x1x15xf32, #tpu.memory_space<vmem>>, vector<1x1x15xf32>,
    } else {
    }
    return
  }
  func.func @transform_0(%arg0: i32, %arg1: i32) -> (i32, i32, i32) {
    %c0_i32 = arith.constant 0 : i32
    %c0_i32_0 = arith.constant 0 : i32
    return %arg0, %arg1, %c0_i32 : i32, i32, i32
  }
  func.func @transform_1(%arg0: i32, %arg1: i32) -> (i32, i32) {
    %c0_i32 = arith.constant 0 : i32
    %c0_i32_0 = arith.constant 0 : i32
    %c0_i32_1 = arith.constant 0 : i32
    return %c0_i32, %c0_i32_0 : i32, i32
  }
  func.func @transform_2(%arg0: i32, %arg1: i32) -> (i32, i32) {
    %c0_i32 = arith.constant 0 : i32
    %c0_i32_0 = arith.constant 0 : i32
    %c0_i32_1 = arith.constant 0 : i32
    return %c0_i32, %c0_i32_0 : i32, i32
  }
  func.func @transform_3(%arg0: i32, %arg1: i32) -> (i32, i32) {
    %c0_i32 = arith.constant 0 : i32
    %c0_i32_0 = arith.constant 0 : i32
    %c0_i32_1 = arith.constant 0 : i32
    return %c0_i32, %c0_i32_0 : i32, i32
  }
  func.func @transform_4(%arg0: i32, %arg1: i32) -> (i32, i32) {
    %c0_i32 = arith.constant 0 : i32
    %c0_i32_0 = arith.constant 0 : i32
    %c0_i32_1 = arith.constant 0 : i32
    return %c0_i32, %c0_i32_0 : i32, i32
  }
  func.func @transform_5(%arg0: i32, %arg1: i32) -> (i32, i32, i32) {
    %c0_i32 = arith.constant 0 : i32
    %c0_i32_0 = arith.constant 0 : i32
    %c0_i32_1 = arith.constant 0 : i32
    return %arg0, %c0_i32, %c0_i32_0 : i32, i32, i32
  }
}

</mosaic_0001>

<llo_original>
// kernel: custom_detector_forward.1
$region0: #{custom_detector_forward.1}
  #allocation0 [shape = 'u32[]', space=smem, size = 0x4, offset = 0x4, fixed_abs, tag = 'smem constant byte address 0x4 - core index']
  #allocation1 [shape = 'u32[144,128]{1,0:T(1,128)}', space=vmem, size = 0x12000, scoped, tag = 'internal scratch']
  #allocation2 [shape = 'f32[1,1280]{1,0:T(1,128)}', space=vmem, size = 0x1400, scoped, tag = 'scratch operand']
  %s0 = inlined_call_operand.vmem [shape: bf16[2,4,1280], index: 0, kind: input, shape index: {}]
  %s1 = inlined_call_operand.vmem [shape: bf16[1280,512], index: 1, kind: input, shape index: {}]
  %s2 = inlined_call_operand.vmem [shape: f32[1,512], index: 2, kind: input, shape index: {}]
  %s3 = inlined_call_operand.vmem [shape: bf16[512,15], index: 3, kind: input, shape index: {}]
  %s4 = inlined_call_operand.vmem [shape: f32[1,15], index: 4, kind: input, shape index: {}]
  %s5 = inlined_call_operand.vmem [shape: f32[2,1,15], index: 5, kind: output, shape index: {}]
  %s6 = sld [smem:[#allocation0]]
  $region61: #{custom_detector_forward.1} parent=0
    _
  %s8 = ssub.s32 1, %s6
  %s9 = scalar_select 0, %s8, %s6
  loop: start=0, step=1, limit=4
  $region2: #{custom_detector_forward.1} parent=0 // loop_pre_header
    _
  $region3: #{custom_detector_forward.1} parent=0 // loop_header
    %s11 = sphi 0, %s15
    %p12 = scmp.ge.s32.totalorder %s11, 4
    %s18 = sphi 0, %s30
    %s19 = sphi 0, %s26
    %s20 = sphi 0, %s18
    %s21 = sphi 0, %s19
    %s22 = sphi 0, %s20
    %s23 = sphi 0, %s21
    %s35 = sphi 0, %s37
    %s38 = sphi 0, %s35
    %s39 = sphi 0, %s38
    %s55 = sphi 0, %s39
    %s59 = sphi 0, %s59
    %s61 = sphi 0, %s59
    %s62 = sphi 0, %s61
    %s76 = sphi 0, %s62
    %s80 = sphi 0, %s80
    %s82 = sphi 0, %s80
    %s83 = sphi 0, %s82
    %s97 = sphi 0, %s83
    %s101 = sphi 0, %s101
    %s103 = sphi 0, %s101
    %s104 = sphi 0, %s103
    %s118 = sphi 0, %s104
    %s122 = sphi 0, %s122
    %s124 = sphi 0, %s122
    %s125 = sphi 0, %s124
    %s139 = sphi 0, %s125
    %s145 = sphi 0, %s147
    %s148 = sphi 0, %s145
    %s149 = sphi 0, %s148
    %s165 = sphi 0, %s149
  $region4: #{custom_detector_forward.1} parent=0 // loop_header_branch
    %14 = sbr.rel (%p12) target = $region8
  $region5: #{custom_detector_forward.1} parent=0 // loop_body
    %s16 = ssub.s32 %s11, 1
    %s17 = ssub.s32 %s11, 2
    %s24 = sadd.s32 1, %s19
    %p25 = scmp.ge.s32.totalorder %s24, 1
    %s26 = scalar_select %p25, 0, %s24
    %s27 = sadd.s32 1, %s18
    %s28 = scalar_select %p25, %s27, %s18
    %p29 = scmp.ge.s32.totalorder %s28, 2
    %s30 = scalar_select %p29, 0, %s28
    %s31 = ssub.s32 %s18, %s30
    %s32 = ssub.s32 %s19, %s26
    %s33 = sor.u32 %s31, %s32
    %p34 = scmp.eq.s32.totalorder %s33, 0
    %s36 = sadd.s32 %s35, 1
    %s37 = scalar_select %p34, %s35, %s36
    %p40 = pneg %p34
    %p41 = scmp.eq.s32.totalorder %s11, 1
    %p42 = por %p40, %p41
    %p43 = scmp.ne.s32.totalorder %s35, %s38
    %p44 = scmp.eq.s32.totalorder %s11, 0
    %p45 = por %p43, %p44
    %p46 = scmp.ne.s32.totalorder %s35, %s38
    %p47 = scmp.eq.s32.totalorder %s16, 1
    %p48 = por %p46, %p47
    %p49 = scmp.ne.s32.totalorder %s38, %s39
    %p50 = scmp.eq.s32.totalorder %s16, 0
    %p51 = por %p49, %p50
    %p52 = scmp.ne.s32.totalorder %s38, %s39
    %p53 = scmp.eq.s32.totalorder %s17, 1
    %p54 = por %p52, %p53
    %p56 = scmp.ne.s32.totalorder %s39, %s55
    %p57 = scmp.eq.s32.totalorder %s17, 0
    %p58 = por %p56, %p57
    %s60 = sadd.s32 %s59, 1
    %p63 = scmp.eq.s32.totalorder %s11, 1
    %p64 = scmp.ne.s32.totalorder %s59, %s61
    %p65 = scmp.eq.s32.totalorder %s11, 0
    %p66 = por %p64, %p65
    %p67 = scmp.ne.s32.totalorder %s59, %s61
    %p68 = scmp.eq.s32.totalorder %s16, 1
    %p69 = por %p67, %p68
    %p70 = scmp.ne.s32.totalorder %s61, %s62
    %p71 = scmp.eq.s32.totalorder %s16, 0
    %p72 = por %p70, %p71
    %p73 = scmp.ne.s32.totalorder %s61, %s62
    %p74 = scmp.eq.s32.totalorder %s17, 1
    %p75 = por %p73, %p74
    %p77 = scmp.ne.s32.totalorder %s62, %s76
    %p78 = scmp.eq.s32.totalorder %s17, 0
    %p79 = por %p77, %p78
    %s81 = sadd.s32 %s80, 1
    %p84 = scmp.eq.s32.totalorder %s11, 1
    %p85 = scmp.ne.s32.totalorder %s80, %s82
    %p86 = scmp.eq.s32.totalorder %s11, 0
    %p87 = por %p85, %p86
    %p88 = scmp.ne.s32.totalorder %s80, %s82
    %p89 = scmp.eq.s32.totalorder %s16, 1
    %p90 = por %p88, %p89
    %p91 = scmp.ne.s32.totalorder %s82, %s83
    %p92 = scmp.eq.s32.totalorder %s16, 0
    %p93 = por %p91, %p92
    %p94 = scmp.ne.s32.totalorder %s82, %s83
    %p95 = scmp.eq.s32.totalorder %s17, 1
    %p96 = por %p94, %p95
    %p98 = scmp.ne.s32.totalorder %s83, %s97
    %p99 = scmp.eq.s32.totalorder %s17, 0
    %p100 = por %p98, %p99
    %s102 = sadd.s32 %s101, 1
    %p105 = scmp.eq.s32.totalorder %s11, 1
    %p106 = scmp.ne.s32.totalorder %s101, %s103
    %p107 = scmp.eq.s32.totalorder %s11, 0
    %p108 = por %p106, %p107
    %p109 = scmp.ne.s32.totalorder %s101, %s103
    %p110 = scmp.eq.s32.totalorder %s16, 1
    %p111 = por %p109, %p110
    %p112 = scmp.ne.s32.totalorder %s103, %s104
    %p113 = scmp.eq.s32.totalorder %s16, 0
    %p114 = por %p112, %p113
    %p115 = scmp.ne.s32.totalorder %s103, %s104
    %p116 = scmp.eq.s32.totalorder %s17, 1
    %p117 = por %p115, %p116
    %p119 = scmp.ne.s32.totalorder %s104, %s118
    %p120 = scmp.eq.s32.totalorder %s17, 0
    %p121 = por %p119, %p120
    %s123 = sadd.s32 %s122, 1
    %p126 = scmp.eq.s32.totalorder %s11, 1
    %p127 = scmp.ne.s32.totalorder %s122, %s124
    %p128 = scmp.eq.s32.totalorder %s11, 0
    %p129 = por %p127, %p128
    %p130 = scmp.ne.s32.totalorder %s122, %s124
    %p131 = scmp.eq.s32.totalorder %s16, 1
    %p132 = por %p130, %p131
    %p133 = scmp.ne.s32.totalorder %s124, %s125
    %p134 = scmp.eq.s32.totalorder %s16, 0
    %p135 = por %p133, %p134
    %p136 = scmp.ne.s32.totalorder %s124, %s125
    %p137 = scmp.eq.s32.totalorder %s17, 1
    %p138 = por %p136, %p137
    %p140 = scmp.ne.s32.totalorder %s125, %s139
    %p141 = scmp.eq.s32.totalorder %s17, 0
    %p142 = por %p140, %p141
    %s143 = ssub.s32 %s18, %s30
    %p144 = scmp.eq.s32.totalorder %s143, 0
    %s146 = sadd.s32 %s145, 1
    %s147 = scalar_select %p144, %s145, %s146
    %p150 = pneg %p144
    %p151 = scmp.eq.s32.totalorder %s11, 1
    %p152 = por %p150, %p151
    %p153 = scmp.ne.s32.totalorder %s145, %s148
    %p154 = scmp.eq.s32.totalorder %s11, 0
    %p155 = por %p153, %p154
    %p156 = scmp.ne.s32.totalorder %s145, %s148
    %p157 = scmp.eq.s32.totalorder %s16, 1
    %p158 = por %p156, %p157
    %p159 = scmp.ne.s32.totalorder %s148, %s149
    %p160 = scmp.eq.s32.totalorder %s16, 0
    %p161 = por %p159, %p160
    %p162 = scmp.ne.s32.totalorder %s148, %s149
    %p163 = scmp.eq.s32.totalorder %s17, 1
    %p164 = por %p162, %p163
    %p166 = scmp.ne.s32.totalorder %s149, %s165
    %p167 = scmp.eq.s32.totalorder %s17, 0
    %p168 = por %p166, %p167
    %p169 = scmp.le.s32.totalorder 1, %s11
    %p170 = scmp.lt.s32.totalorder %s11, 3
    %p171 = pnand %p169, %p170
    %p172 = pneg %p171
    // Predicated region
    $region9: #{custom_detector_forward.1} parent=5 // pred_check
      _
    $region10: #{custom_detector_forward.1} parent=5 // pred_check_branch
      %174 = sbr.rel (%p171) target = $region12
    $region11: #{custom_detector_forward.1} parent=5 // pred_region
      %s175 = ssub.s32 %s11, 1
      // Predicated region
      $region13: #{custom_detector_forward.1} parent=11 // pred_check
        %p176 = pneg %p72
      $region14: #{custom_detector_forward.1} parent=11 // pred_check_branch
        %178 = sbr.rel (%p176) target = $region16
      $region15: #{custom_detector_forward.1} parent=11 // pred_region
        _
      $region16: #{custom_detector_forward.1} parent=11 // pred_fallthru
        _
      // Predicated region
      $region17: #{custom_detector_forward.1} parent=11 // pred_check
        %p179 = pneg %p93
      $region18: #{custom_detector_forward.1} parent=11 // pred_check_branch
        %181 = sbr.rel (%p179) target = $region20
      $region19: #{custom_detector_forward.1} parent=11 // pred_region
        _
      $region20: #{custom_detector_forward.1} parent=11 // pred_fallthru
        _
      // Predicated region
      $region21: #{custom_detector_forward.1} parent=11 // pred_check
        %p182 = pneg %p114
      $region22: #{custom_detector_forward.1} parent=11 // pred_check_branch
        %184 = sbr.rel (%p182) target = $region24
      $region23: #{custom_detector_forward.1} parent=11 // pred_region
        _
      $region24: #{custom_detector_forward.1} parent=11 // pred_fallthru
        _
      // Predicated region
      $region25: #{custom_detector_forward.1} parent=11 // pred_check
        %p185 = pneg %p135
      $region26: #{custom_detector_forward.1} parent=11 // pred_check_branch
        %187 = sbr.rel (%p185) target = $region28
      $region27: #{custom_detector_forward.1} parent=11 // pred_region
        _
      $region28: #{custom_detector_forward.1} parent=11 // pred_fallthru
        _
    $region12: #{custom_detector_forward.1} parent=5 // pred_fallthru
      _
    %p188 = scmp.lt.s32.totalorder %s11, 2
    // Predicated region
    $region29: #{custom_detector_forward.1} parent=5 // pred_check
      %p189 = pneg %p188
    $region30: #{custom_detector_forward.1} parent=5 // pred_check_branch
      %191 = sbr.rel (%p189) target = $region32
    $region31: #{custom_detector_forward.1} parent=5 // pred_region
      // Predicated region
      $region33: #{custom_detector_forward.1} parent=31 // pred_check
        %p192 = pneg %p45
      $region34: #{custom_detector_forward.1} parent=31 // pred_check_branch
        %194 = sbr.rel (%p192) target = $region36
      $region35: #{custom_detector_forward.1} parent=31 // pred_region
        %p195 = scmp.lt.s32.totalorder %s18, 1
        %s196 = scalar_select %p195, %s18, 1
        %p197 = scmp.lt.s32.totalorder %s19, 0
        %s198 = scalar_select %p197, %s19, 0
        %s199 = smul.addr %s198, 10
        %s200 = smul.addr %s196, 10
        %s201 = sadd.s32 %s199, %s200
        %s202 = smul.addr %s201, 2
        %s203 = scalar_lea.vmem %s0, %s202
      $region36: #{custom_detector_forward.1} parent=31 // pred_fallthru
        _
    $region32: #{custom_detector_forward.1} parent=5 // pred_fallthru
      _
    %p204 = scmp.le.s32.totalorder 1, %s11
    %p205 = scmp.lt.s32.totalorder %s11, 3
    %p206 = pnand %p204, %p205
    %p207 = pneg %p206
    // Predicated region
    $region37: #{custom_detector_forward.1} parent=5 // pred_check
      _
    $region38: #{custom_detector_forward.1} parent=5 // pred_check_branch
      %209 = sbr.rel (%p206) target = $region40
    $region39: #{custom_detector_forward.1} parent=5 // pred_region
      %s210 = ssub.s32 %s11, 1
      %p211 = scmp.lt.s32.totalorder %s20, 1
      %s212 = scalar_select %p211, %s20, 1
      %p213 = scmp.lt.s32.totalorder %s21, 0
      %s214 = scalar_select %p213, %s21, 0
      %s215 = smul.addr %s214, 10
      %s216 = smul.addr %s212, 10
      %s217 = sadd.s32 %s215, %s216
      %s218 = smul.addr %s217, 2
      %s219 = scalar_lea.vmem %s0, %s218
      %p220 = pneg %p51
      %p221 = pneg %p48
      %p222 = pneg %p72
      %p223 = pneg %p69
      %p224 = pneg %p93
      %p225 = pneg %p90
      %p226 = pneg %p114
      %p227 = pneg %p111
      %p228 = pneg %p135
      %p229 = pneg %p132
      %p230 = pneg %p161
      %p231 = pneg %p158
      %p232 = scmp.lt.s32.totalorder %s20, 1
      %s233 = scalar_select %p232, %s20, 1
      %s234 = scalar_lea.vmem %s5, %s233
      %p235 = scmp.lt.s32.totalorder %s20, 1
      %s236 = scalar_select %p235, %s20, 1
      %p237 = scmp.lt.s32.totalorder %s21, 0
      %s238 = scalar_select %p237, %s21, 0
      %s239 = smul.addr %s238, 10
      %s240 = smul.addr %s236, 10
      %s241 = sadd.s32 %s239, %s240
      %s242 = smul.addr %s241, 2
      %s243 = scalar_lea.vmem %s0, %s242
      %p244 = scmp.lt.s32.totalorder %s20, 1
      %s245 = scalar_select %p244, %s20, 1
      %s246 = scalar_lea.vmem %s5, %s245
      %p249 = scmp.eq.s32.totalorder %s21, 0
      // Predicated region
      $region41: #{custom_detector_forward.1} parent=39 // pred_check
        %p250 = pneg %p249
      $region42: #{custom_detector_forward.1} parent=39 // pred_check_branch
        %252 = sbr.rel (%p250) target = $region44
      $region43: #{custom_detector_forward.1} parent=39 // pred_region
        %253 = vst [vmem:[#allocation2] sm:$0xff] 0.0
        %v254 = vlaneseq
        %vm255 = vcmp.ge.s32.totalorder %v254, 0
        %vm256 = vcmp.lt.s32.totalorder %v254, 256
        %vm257 = vmand %vm255, %vm256
        %258 = vst.msk [vmem:[#allocation2 + $0x8] sm:$0x3] %vm257, 0.0
      $region44: #{custom_detector_forward.1} parent=39 // pred_fallthru
        _
      %v259 = vld [vmem:[%s243] sm:$0xff]
      %v260 = vld [vmem:[%s243 + $0x8] sm:$0xff]
      %v261 = vld [vmem:[%s243 + $0x10] sm:$0xf]
      %v262 = vld [vmem:[#allocation2] sm:$0xff]
      %v263 = vld [vmem:[#allocation2 + $0x8] sm:$0x3]
      %v267 = vcombine.high %v259, %v259
      %v269 = vunpack.c.l.s4 1983009808
      %v270 = vunpack.c.0.s8 %v269
      %v271 = vlaneseq
      %v272 = vshrl.u32 %v271, 7
      %v273 = vsub.s32 %v270, %v272
      %v274 = vrot.slane %v259, %v273
      %v276 = vunpack.c.l.s4 1983009808
      %v277 = vunpack.c.0.s8 %v276
      %v278 = vlaneseq
      %v279 = vshrl.u32 %v278, 7
      %v280 = vsub.s32 %v277, %v279
      %v281 = vrot.slane %v267, %v280
      %v282 = vcombine.high %v274, %v274
      %v283 = vcombine.high %v281, %v281
      %v284 = vcombine.high %v260, %v260
      %v286 = vunpack.c.l.s4 1983009808
      %v287 = vunpack.c.0.s8 %v286
      %v288 = vlaneseq
      %v289 = vshrl.u32 %v288, 7
      %v290 = vsub.s32 %v287, %v289
      %v291 = vrot.slane %v260, %v290
      %v293 = vunpack.c.l.s4 1983009808
      %v294 = vunpack.c.0.s8 %v293
      %v295 = vlaneseq
      %v296 = vshrl.u32 %v295, 7
      %v297 = vsub.s32 %v294, %v296
      %v298 = vrot.slane %v284, %v297
      %v299 = vcombine.high %v291, %v291
      %v300 = vcombine.high %v298, %v298
      %v302 = vunpack.c.l.s4 1983009808
      %v303 = vunpack.c.0.s8 %v302
      %v304 = vlaneseq
      %v305 = vshrl.u32 %v304, 7
      %v306 = vsub.s32 %v303, %v305
      %v307 = vrot.slane %v261, %v306
      %v308 = vcombine.high %v307, %v307
      %vm309 = vcmask 31744
      %v311 = vsel %vm309, 1065369472, 0
      %vm313 = vcmask 1041408
      %v315 = vsel %vm313, %v274, 0
      %v318 = vsel %vm313, %v282, 0
      %v321 = vsel %vm313, %v281, 0
      %v324 = vsel %vm313, %v283, 0
      %v327 = vsel %vm313, %v291, 0
      %v330 = vsel %vm313, %v299, 0
      %v333 = vsel %vm313, %v298, 0
      %v336 = vsel %vm313, %v300, 0
      %v339 = vsel %vm313, %v307, 0
      %v342 = vsel %vm313, %v308, 0
      %344 = vmatprep.subr.bf16.mxu0 %v318
      %345 = vmatpush1.bf16.msra.mxu0 %v315
      %346 = vmatprep.subr.bf16.mxu0 0
      %347 = vmatpush1.bf16.msra.mxu0 0
      %348 = vmatprep.subr.bf16.mxu0 0
      %349 = vmatpush1.bf16.msra.mxu0 0
      %350 = vmatprep.subr.bf16.mxu0 0
      %351 = vmatpush1.bf16.msra.mxu0 0
      %352 = vmatprep.subr.bf16.mxu0 0
      %353 = vmatpush1.bf16.msra.mxu0 0
      %354 = vmatprep.subr.bf16.mxu0 0
      %355 = vmatpush1.bf16.msra.mxu0 0
      %356 = vmatprep.subr.bf16.mxu0 0
      %357 = vmatpush1.bf16.msra.mxu0 0
      %358 = vmatprep.subr.bf16.mxu0 0
      %359 = vmatpush1.bf16.msra.mxu0 0
      %360 = vmatprep.subr.bf16.mxu0 0
      %361 = vmatpush1.bf16.msra.mxu0 0
      %362 = vmatprep.subr.bf16.mxu0 0
      %363 = vmatpush1.bf16.msra.mxu0 0
      %364 = vmatprep.subr.bf16.mxu0 0
      %365 = vmatpush1.bf16.msra.mxu0 0
      %366 = vmatprep.subr.bf16.mxu0 0
      %367 = vmatpush1.bf16.msra.mxu0 0
      %368 = vmatprep.subr.bf16.mxu0 0
      %369 = vmatpush1.bf16.msra.mxu0 0
      %370 = vmatprep.subr.bf16.mxu0 0
      %371 = vmatpush1.bf16.msra.mxu0 0
      %372 = vmatprep.subr.bf16.mxu0 0
      %373 = vmatpush1.bf16.msra.mxu0 0
      %374 = vmatprep.subr.bf16.mxu0 0
      %375 = vmatpush1.bf16.msra.mxu0 0
      %376 = vmatprep.mubr.bf16.mxu0 0
      %377 = vmatmul.mubr.bf16.gmra.mrb[0].mxu0 %v311
      %v378 = vpop.f32.mrb[0].mxu0
      %v379 = vadd.f32 0.0, %v378
      %v380 = vpop.f32.mrb[0].mxu0
      %v381 = vadd.f32 0.0, %v380
      %v382 = vpop.f32.mrb[0].mxu0
      %v383 = vpop.f32.mrb[0].mxu0
      %384 = vdwg.mxu0
      %385 = vmatprep.subr.bf16.mxu0 %v324
      %386 = vmatpush1.bf16.msra.mxu0 %v321
      %387 = vmatprep.subr.bf16.mxu0 0
      %388 = vmatpush1.bf16.msra.mxu0 0
      %389 = vmatprep.subr.bf16.mxu0 0
      %390 = vmatpush1.bf16.msra.mxu0 0
      %391 = vmatprep.subr.bf16.mxu0 0
      %392 = vmatpush1.bf16.msra.mxu0 0
      %393 = vmatprep.subr.bf16.mxu0 0
      %394 = vmatpush1.bf16.msra.mxu0 0
      %395 = vmatprep.subr.bf16.mxu0 0
      %396 = vmatpush1.bf16.msra.mxu0 0
      %397 = vmatprep.subr.bf16.mxu0 0
      %398 = vmatpush1.bf16.msra.mxu0 0
      %399 = vmatprep.subr.bf16.mxu0 0
      %400 = vmatpush1.bf16.msra.mxu0 0
      %401 = vmatprep.subr.bf16.mxu0 0
      %402 = vmatpush1.bf16.msra.mxu0 0
      %403 = vmatprep.subr.bf16.mxu0 0
      %404 = vmatpush1.bf16.msra.mxu0 0
      %405 = vmatprep.subr.bf16.mxu0 0
      %406 = vmatpush1.bf16.msra.mxu0 0
      %407 = vmatprep.subr.bf16.mxu0 0
      %408 = vmatpush1.bf16.msra.mxu0 0
      %409 = vmatprep.subr.bf16.mxu0 0
      %410 = vmatpush1.bf16.msra.mxu0 0
      %411 = vmatprep.subr.bf16.mxu0 0
      %412 = vmatpush1.bf16.msra.mxu0 0
      %413 = vmatprep.subr.bf16.mxu0 0
      %414 = vmatpush1.bf16.msra.mxu0 0
      %415 = vmatprep.subr.bf16.mxu0 0
      %416 = vmatpush1.bf16.msra.mxu0 0
      %417 = vmatprep.mubr.bf16.mxu0 0
      %418 = vmatmul.mubr.bf16.gmra.mrb[0].mxu0 %v311
      %v419 = vpop.f32.mrb[0].mxu0
      %v420 = vadd.f32 0.0, %v419
      %v421 = vpop.f32.mrb[0].mxu0
      %v422 = vadd.f32 0.0, %v421
      %v423 = vpop.f32.mrb[0].mxu0
      %v424 = vpop.f32.mrb[0].mxu0
      %425 = vdwg.mxu0
      %426 = vmatprep.subr.bf16.mxu0 %v330
      %427 = vmatpush1.bf16.msra.mxu0 %v327
      %428 = vmatprep.subr.bf16.mxu0 0
      %429 = vmatpush1.bf16.msra.mxu0 0
      %430 = vmatprep.subr.bf16.mxu0 0
      %431 = vmatpush1.bf16.msra.mxu0 0
      %432 = vmatprep.subr.bf16.mxu0 0
      %433 = vmatpush1.bf16.msra.mxu0 0
      %434 = vmatprep.subr.bf16.mxu0 0
      %435 = vmatpush1.bf16.msra.mxu0 0
      %436 = vmatprep.subr.bf16.mxu0 0
      %437 = vmatpush1.bf16.msra.mxu0 0
      %438 = vmatprep.subr.bf16.mxu0 0
      %439 = vmatpush1.bf16.msra.mxu0 0
      %440 = vmatprep.subr.bf16.mxu0 0
      %441 = vmatpush1.bf16.msra.mxu0 0
      %442 = vmatprep.subr.bf16.mxu0 0
      %443 = vmatpush1.bf16.msra.mxu0 0
      %444 = vmatprep.subr.bf16.mxu0 0
      %445 = vmatpush1.bf16.msra.mxu0 0
      %446 = vmatprep.subr.bf16.mxu0 0
      %447 = vmatpush1.bf16.msra.mxu0 0
      %448 = vmatprep.subr.bf16.mxu0 0
      %449 = vmatpush1.bf16.msra.mxu0 0
      %450 = vmatprep.subr.bf16.mxu0 0
      %451 = vmatpush1.bf16.msra.mxu0 0
      %452 = vmatprep.subr.bf16.mxu0 0
      %453 = vmatpush1.bf16.msra.mxu0 0
      %454 = vmatprep.subr.bf16.mxu0 0
      %455 = vmatpush1.bf16.msra.mxu0 0
      %456 = vmatprep.subr.bf16.mxu0 0
      %457 = vmatpush1.bf16.msra.mxu0 0
      %458 = vmatprep.mubr.bf16.mxu0 0
      %459 = vmatmul.mubr.bf16.gmra.mrb[0].mxu0 %v311
      %v460 = vpop.f32.mrb[0].mxu0
      %v461 = vadd.f32 0.0, %v460
      %v462 = vpop.f32.mrb[0].mxu0
      %v463 = vadd.f32 0.0, %v462
      %v464 = vpop.f32.mrb[0].mxu0
      %v465 = vpop.f32.mrb[0].mxu0
      %466 = vdwg.mxu0
      %467 = vmatprep.subr.bf16.mxu0 %v336
      %468 = vmatpush1.bf16.msra.mxu0 %v333
      %469 = vmatprep.subr.bf16.mxu0 0
      %470 = vmatpush1.bf16.msra.mxu0 0
      %471 = vmatprep.subr.bf16.mxu0 0
      %472 = vmatpush1.bf16.msra.mxu0 0
      %473 = vmatprep.subr.bf16.mxu0 0
      %474 = vmatpush1.bf16.msra.mxu0 0
      %475 = vmatprep.subr.bf16.mxu0 0
      %476 = vmatpush1.bf16.msra.mxu0 0
      %477 = vmatprep.subr.bf16.mxu0 0
      %478 = vmatpush1.bf16.msra.mxu0 0
      %479 = vmatprep.subr.bf16.mxu0 0
      %480 = vmatpush1.bf16.msra.mxu0 0
      %481 = vmatprep.subr.bf16.mxu0 0
      %482 = vmatpush1.bf16.msra.mxu0 0
      %483 = vmatprep.subr.bf16.mxu0 0
      %484 = vmatpush1.bf16.msra.mxu0 0
      %485 = vmatprep.subr.bf16.mxu0 0
      %486 = vmatpush1.bf16.msra.mxu0 0
      %487 = vmatprep.subr.bf16.mxu0 0
      %488 = vmatpush1.bf16.msra.mxu0 0
      %489 = vmatprep.subr.bf16.mxu0 0
      %490 = vmatpush1.bf16.msra.mxu0 0
      %491 = vmatprep.subr.bf16.mxu0 0
      %492 = vmatpush1.bf16.msra.mxu0 0
      %493 = vmatprep.subr.bf16.mxu0 0
      %494 = vmatpush1.bf16.msra.mxu0 0
      %495 = vmatprep.subr.bf16.mxu0 0
      %496 = vmatpush1.bf16.msra.mxu0 0
      %497 = vmatprep.subr.bf16.mxu0 0
      %498 = vmatpush1.bf16.msra.mxu0 0
      %499 = vmatprep.mubr.bf16.mxu0 0
      %500 = vmatmul.mubr.bf16.gmra.mrb[0].mxu0 %v311
      %v501 = vpop.f32.mrb[0].mxu0
      %v502 = vadd.f32 0.0, %v501
      %v503 = vpop.f32.mrb[0].mxu0
      %v504 = vadd.f32 0.0, %v503
      %v505 = vpop.f32.mrb[0].mxu0
      %v506 = vpop.f32.mrb[0].mxu0
      %507 = vdwg.mxu0
      %508 = vmatprep.subr.bf16.mxu0 %v342
      %509 = vmatpush1.bf16.msra.mxu0 %v339
      %510 = vmatprep.subr.bf16.mxu0 0
      %511 = vmatpush1.bf16.msra.mxu0 0
      %512 = vmatprep.subr.bf16.mxu0 0
      %513 = vmatpush1.bf16.msra.mxu0 0
      %514 = vmatprep.subr.bf16.mxu0 0
      %515 = vmatpush1.bf16.msra.mxu0 0
      %516 = vmatprep.subr.bf16.mxu0 0
      %517 = vmatpush1.bf16.msra.mxu0 0
      %518 = vmatprep.subr.bf16.mxu0 0
      %519 = vmatpush1.bf16.msra.mxu0 0
      %520 = vmatprep.subr.bf16.mxu0 0
      %521 = vmatpush1.bf16.msra.mxu0 0
      %522 = vmatprep.subr.bf16.mxu0 0
      %523 = vmatpush1.bf16.msra.mxu0 0
      %524 = vmatprep.subr.bf16.mxu0 0
      %525 = vmatpush1.bf16.msra.mxu0 0
      %526 = vmatprep.subr.bf16.mxu0 0
      %527 = vmatpush1.bf16.msra.mxu0 0
      %528 = vmatprep.subr.bf16.mxu0 0
      %529 = vmatpush1.bf16.msra.mxu0 0
      %530 = vmatprep.subr.bf16.mxu0 0
      %531 = vmatpush1.bf16.msra.mxu0 0
      %532 = vmatprep.subr.bf16.mxu0 0
      %533 = vmatpush1.bf16.msra.mxu0 0
      %534 = vmatprep.subr.bf16.mxu0 0
      %535 = vmatpush1.bf16.msra.mxu0 0
      %536 = vmatprep.subr.bf16.mxu0 0
      %537 = vmatpush1.bf16.msra.mxu0 0
      %538 = vmatprep.subr.bf16.mxu0 0
      %539 = vmatpush1.bf16.msra.mxu0 0
      %540 = vmatprep.mubr.bf16.mxu0 0
      %541 = vmatmul.mubr.bf16.gmra.mrb[0].mxu0 %v311
      %v542 = vpop.f32.mrb[0].mxu0
      %v543 = vadd.f32 0.0, %v542
      %v544 = vpop.f32.mrb[0].mxu0
      %v545 = vadd.f32 0.0, %v544
      %v546 = vpop.f32.mrb[0].mxu0
      %v547 = vpop.f32.mrb[0].mxu0
      %548 = vdwg.mxu0
      %v559 = vcombine.low %v379, %v381
      %v560 = vcombine.low %v420, %v422
      %v561 = vcombine.low %v461, %v463
      %v562 = vcombine.low %v502, %v504
      %v564 = vunpack.c.l.s4 1966171168
      %v565 = vunpack.c.0.s8 %v564
      %v566 = vlaneseq
      %v567 = vshrl.u32 %v566, 7
      %v568 = vsub.s32 %v565, %v567
      %v569 = vrot.slane %v559, %v568
      %v571 = vunpack.c.l.s4 1966171168
      %v572 = vunpack.c.0.s8 %v571
      %v573 = vlaneseq
      %v574 = vshrl.u32 %v573, 7
      %v575 = vsub.s32 %v572, %v574
      %v576 = vrot.slane %v560, %v575
      %v578 = vunpack.c.l.s4 1966171168
      %v579 = vunpack.c.0.s8 %v578
      %v580 = vlaneseq
      %v581 = vshrl.u32 %v580, 7
      %v582 = vsub.s32 %v579, %v581
      %v583 = vrot.slane %v561, %v582
      %v585 = vunpack.c.l.s4 1966171168
      %v586 = vunpack.c.0.s8 %v585
      %v587 = vlaneseq
      %v588 = vshrl.u32 %v587, 7
      %v589 = vsub.s32 %v586, %v588
      %v590 = vrot.slane %v562, %v589
      %v591 = vcombine.low %v569, %v576
      %v592 = vcombine.low %v583, %v590
      %v594 = vunpack.c.l.s4 1966171168
      %v595 = vunpack.c.0.s8 %v594
      %v596 = vlaneseq
      %v597 = vshrl.u32 %v596, 7
      %v598 = vsub.s32 %v595, %v597
      %v599 = vrot.slane %v591, %v598
      %v601 = vunpack.c.l.s4 1966171168
      %v602 = vunpack.c.0.s8 %v601
      %v603 = vlaneseq
      %v604 = vshrl.u32 %v603, 7
      %v605 = vsub.s32 %v602, %v604
      %v606 = vrot.slane %v592, %v605
      %v607 = vcombine.low %v599, %v606
      %v608 = vcombine.low %v543, %v545
      %v610 = vunpack.c.l.s4 1966171168
      %v611 = vunpack.c.0.s8 %v610
      %v612 = vlaneseq
      %v613 = vshrl.u32 %v612, 7
      %v614 = vsub.s32 %v611, %v613
      %v615 = vrot.slane %v608, %v614
      %v617 = vunpack.c.l.s4 1966171168
      %v618 = vunpack.c.0.s8 %v617
      %v619 = vlaneseq
      %v620 = vshrl.u32 %v619, 7
      %v621 = vsub.s32 %v618, %v620
      %v622 = vrot.slane %v615, %v621
      %v625 = vadd.f32 %v262, %v607
      %v626 = vadd.f32 %v263, %v622
      %627 = vst [vmem:[#allocation2] sm:$0xff] %v625
      %v628 = vlaneseq
      %vm629 = vcmp.ge.s32.totalorder %v628, 0
      %vm630 = vcmp.lt.s32.totalorder %v628, 256
      %vm631 = vmand %vm629, %vm630
      %632 = vst.msk [vmem:[#allocation2 + $0x8] sm:$0x3] %vm631, %v626
      // Predicated region
      $region45: #{custom_detector_forward.1} parent=39 // pred_check
        %p633 = pneg %p249
      $region46: #{custom_detector_forward.1} parent=39 // pred_check_branch
        %635 = sbr.rel (%p633) target = $region48
      $region47: #{custom_detector_forward.1} parent=39 // pred_region
        %v636 = vld [vmem:[#allocation2] sm:$0xff]
        %v637 = vld [vmem:[#allocation2 + $0x8] sm:$0x3]
        %v638 = vmul.f32 %v636, 0.25
        %v639 = vmul.f32 %v637, 0.25
        %v642 = vlaneseq
        %v643 = vshrl.u32 %v642, 7
        %v644 = vsub.s32 0, %v643
        %v645 = vrot.slane %v638, %v644
        %v646 = vlaneseq
        %v647 = vshrl.u32 %v646, 7
        %v648 = vsub.s32 1, %v647
        %v649 = vrot.slane %v638, %v648
        %v650 = vlaneseq
        %v651 = vshrl.u32 %v650, 7
        %v652 = vsub.s32 2, %v651
        %v653 = vrot.slane %v638, %v652
        %v654 = vlaneseq
        %v655 = vshrl.u32 %v654, 7
        %v656 = vsub.s32 3, %v655
        %v657 = vrot.slane %v638, %v656
        %v658 = vlaneseq
        %v659 = vshrl.u32 %v658, 7
        %v660 = vsub.s32 4, %v659
        %v661 = vrot.slane %v638, %v660
        %v662 = vlaneseq
        %v663 = vshrl.u32 %v662, 7
        %v664 = vsub.s32 5, %v663
        %v665 = vrot.slane %v638, %v664
        %v666 = vlaneseq
        %v667 = vshrl.u32 %v666, 7
        %v668 = vsub.s32 6, %v667
        %v669 = vrot.slane %v638, %v668
        %v670 = vlaneseq
        %v671 = vshrl.u32 %v670, 7
        %v672 = vsub.s32 7, %v671
        %v673 = vrot.slane %v638, %v672
        %v674 = vlaneseq
        %v675 = vshrl.u32 %v674, 7
        %v676 = vsub.s32 0, %v675
        %v677 = vrot.slane %v639, %v676
        %v678 = vlaneseq
        %v679 = vshrl.u32 %v678, 7
        %v680 = vsub.s32 1, %v679
        %v681 = vrot.slane %v639, %v680
        %v692 = vpack.c.bf16 %v645, %v645
        %v693 = vpack.c.bf16 %v649, %v649
        %v694 = vpack.c.bf16 %v653, %v653
        %v695 = vpack.c.bf16 %v657, %v657
        %v696 = vpack.c.bf16 %v661, %v661
        %v697 = vpack.c.bf16 %v665, %v665
        %v698 = vpack.c.bf16 %v669, %v669
        %v699 = vpack.c.bf16 %v673, %v673
        %v700 = vpack.c.bf16 %v677, %v677
        %v701 = vpack.c.bf16 %v681, %v681
        %v702 = vld [vmem:[%s1] sm:$0xff]
        %v703 = vld [vmem:[%s1 + $0x8] sm:$0xff]
        %v704 = vld [vmem:[%s1 + $0x10] sm:$0xff]
        %v705 = vld [vmem:[%s1 + $0x18] sm:$0xff]
        %v706 = vld [vmem:[%s1 + $0x20] sm:$0xff]
        %v707 = vld [vmem:[%s1 + $0x28] sm:$0xff]
        %v708 = vld [vmem:[%s1 + $0x30] sm:$0xff]
        %v709 = vld [vmem:[%s1 + $0x38] sm:$0xff]
        %v710 = vld [vmem:[%s1 + $0x40] sm:$0xff]
        %v711 = vld [vmem:[%s1 + $0x48] sm:$0xff]
        %v712 = vld [vmem:[%s1 + $0x50] sm:$0xff]
        %v713 = vld [vmem:[%s1 + $0x58] sm:$0xff]
        %v714 = vld [vmem:[%s1 + $0x60] sm:$0xff]
        %v715 = vld [vmem:[%s1 + $0x68] sm:$0xff]
        %v716 = vld [vmem:[%s1 + $0x70] sm:$0xff]
        %v717 = vld [vmem:[%s1 + $0x78] sm:$0xff]
        %v718 = vld [vmem:[%s1 + $0x80] sm:$0xff]
        %v719 = vld [vmem:[%s1 + $0x88] sm:$0xff]
        %v720 = vld [vmem:[%s1 + $0x90] sm:$0xff]
        %v721 = vld [vmem:[%s1 + $0x98] sm:$0xff]
        %v722 = vld [vmem:[%s1 + $0xa0] sm:$0xff]
        %v723 = vld [vmem:[%s1 + $0xa8] sm:$0xff]
        %v724 = vld [vmem:[%s1 + $0xb0] sm:$0xff]
        %v725 = vld [vmem:[%s1 + $0xb8] sm:$0xff]
        %v726 = vld [vmem:[%s1 + $0xc0] sm:$0xff]
        %v727 = vld [vmem:[%s1 + $0xc8] sm:$0xff]
        %v728 = vld [vmem:[%s1 + $0xd0] sm:$0xff]
        %v729 = vld [vmem:[%s1 + $0xd8] sm:$0xff]
        %v730 = vld [vmem:[%s1 + $0xe0] sm:$0xff]
        %v731 = vld [vmem:[%s1 + $0xe8] sm:$0xff]
        %v732 = vld [vmem:[%s1 + $0xf0] sm:$0xff]
        %v733 = vld [vmem:[%s1 + $0xf8] sm:$0xff]
        %v734 = vld [vmem:[%s1 + $0x100] sm:$0xff]
        %v735 = vld [vmem:[%s1 + $0x108] sm:$0xff]
        %v736 = vld [vmem:[%s1 + $0x110] sm:$0xff]
        %v737 = vld [vmem:[%s1 + $0x118] sm:$0xff]
        %v738 = vld [vmem:[%s1 + $0x120] sm:$0xff]
        %v739 = vld [vmem:[%s1 + $0x128] sm:$0xff]
        %v740 = vld [vmem:[%s1 + $0x130] sm:$0xff]
        %v741 = vld [vmem:[%s1 + $0x138] sm:$0xff]
        %v742 = vld [vmem:[%s1 + $0x140] sm:$0xff]
        %v743 = vld [vmem:[%s1 + $0x148] sm:$0xff]
        %v744 = vld [vmem:[%s1 + $0x150] sm:$0xff]
        %v745 = vld [vmem:[%s1 + $0x158] sm:$0xff]
        %v746 = vld [vmem:[%s1 + $0x160] sm:$0xff]
        %v747 = vld [vmem:[%s1 + $0x168] sm:$0xff]
        %v748 = vld [vmem:[%s1 + $0x170] sm:$0xff]
        %v749 = vld [vmem:[%s1 + $0x178] sm:$0xff]
        %v750 = vld [vmem:[%s1 + $0x180] sm:$0xff]
        %v751 = vld [vmem:[%s1 + $0x188] sm:$0xff]
        %v752 = vld [vmem:[%s1 + $0x190] sm:$0xff]
        %v753 = vld [vmem:[%s1 + $0x198] sm:$0xff]
        %v754 = vld [vmem:[%s1 + $0x1a0] sm:$0xff]
        %v755 = vld [vmem:[%s1 + $0x1a8] sm:$0xff]
        %v756 = vld [vmem:[%s1 + $0x1b0] sm:$0xff]
        %v757 = vld [vmem:[%s1 + $0x1b8] sm:$0xff]
        %v758 = vld [vmem:[%s1 + $0x1c0] sm:$0xff]
        %v759 = vld [vmem:[%s1 + $0x1c8] sm:$0xff]
        %v760 = vld [vmem:[%s1 + $0x1d0] sm:$0xff]
        %v761 = vld [vmem:[%s1 + $0x1d8] sm:$0xff]
        %v762 = vld [vmem:[%s1 + $0x1e0] sm:$0xff]
        %v763 = vld [vmem:[%s1 + $0x1e8] sm:$0xff]
        %v764 = vld [vmem:[%s1 + $0x1f0] sm:$0xff]
        %v765 = vld [vmem:[%s1 + $0x1f8] sm:$0xff]
        %v766 = vld [vmem:[%s1 + $0x200] sm:$0xff]
        %v767 = vld [vmem:[%s1 + $0x208] sm:$0xff]
        %v768 = vld [vmem:[%s1 + $0x210] sm:$0xff]
        %v769 = vld [vmem:[%s1 + $0x218] sm:$0xff]
        %v770 = vld [vmem:[%s1 + $0x220] sm:$0xff]
        %v771 = vld [vmem:[%s1 + $0x228] sm:$0xff]
        %v772 = vld [vmem:[%s1 + $0x230] sm:$0xff]
        %v773 = vld [vmem:[%s1 + $0x238] sm:$0xff]
        %v774 = vld [vmem:[%s1 + $0x240] sm:$0xff]
        %v775 = vld [vmem:[%s1 + $0x248] sm:$0xff]
        %v776 = vld [vmem:[%s1 + $0x250] sm:$0xff]
        %v777 = vld [vmem:[%s1 + $0x258] sm:$0xff]
        %v778 = vld [vmem:[%s1 + $0x260] sm:$0xff]
        %v779 = vld [vmem:[%s1 + $0x268] sm:$0xff]
        %v780 = vld [vmem:[%s1 + $0x270] sm:$0xff]
        %v781 = vld [vmem:[%s1 + $0x278] sm:$0xff]
        %v782 = vld [vmem:[%s1 + $0x280] sm:$0xff]
        %v783 = vld [vmem:[%s1 + $0x288] sm:$0xff]
        %v784 = vld [vmem:[%s1 + $0x290] sm:$0xff]
        %v785 = vld [vmem:[%s1 + $0x298] sm:$0xff]
        %v786 = vld [vmem:[%s1 + $0x2a0] sm:$0xff]
        %v787 = vld [vmem:[%s1 + $0x2a8] sm:$0xff]
        %v788 = vld [vmem:[%s1 + $0x2b0] sm:$0xff]
        %v789 = vld [vmem:[%s1 + $0x2b8] sm:$0xff]
        %v790 = vld [vmem:[%s1 + $0x2c0] sm:$0xff]
        %v791 = vld [vmem:[%s1 + $0x2c8] sm:$0xff]
        %v792 = vld [vmem:[%s1 + $0x2d0] sm:$0xff]
        %v793 = vld [vmem:[%s1 + $0x2d8] sm:$0xff]
        %v794 = vld [vmem:[%s1 + $0x2e0] sm:$0xff]
        %v795 = vld [vmem:[%s1 + $0x2e8] sm:$0xff]
        %v796 = vld [vmem:[%s1 + $0x2f0] sm:$0xff]
        %v797 = vld [vmem:[%s1 + $0x2f8] sm:$0xff]
        %v798 = vld [vmem:[%s1 + $0x300] sm:$0xff]
        %v799 = vld [vmem:[%s1 + $0x308] sm:$0xff]
        %v800 = vld [vmem:[%s1 + $0x310] sm:$0xff]
        %v801 = vld [vmem:[%s1 + $0x318] sm:$0xff]
        %v802 = vld [vmem:[%s1 + $0x320] sm:$0xff]
        %v803 = vld [vmem:[%s1 + $0x328] sm:$0xff]
        %v804 = vld [vmem:[%s1 + $0x330] sm:$0xff]
        %v805 = vld [vmem:[%s1 + $0x338] sm:$0xff]
        %v806 = vld [vmem:[%s1 + $0x340] sm:$0xff]
        %v807 = vld [vmem:[%s1 + $0x348] sm:$0xff]
        %v808 = vld [vmem:[%s1 + $0x350] sm:$0xff]
        %v809 = vld [vmem:[%s1 + $0x358] sm:$0xff]
        %v810 = vld [vmem:[%s1 + $0x360] sm:$0xff]
        %v811 = vld [vmem:[%s1 + $0x368] sm:$0xff]
        %v812 = vld [vmem:[%s1 + $0x370] sm:$0xff]
        %v813 = vld [vmem:[%s1 + $0x378] sm:$0xff]
        %v814 = vld [vmem:[%s1 + $0x380] sm:$0xff]
        %v815 = vld [vmem:[%s1 + $0x388] sm:$0xff]
        %v816 = vld [vmem:[%s1 + $0x390] sm:$0xff]
        %v817 = vld [vmem:[%s1 + $0x398] sm:$0xff]
        %v818 = vld [vmem:[%s1 + $0x3a0] sm:$0xff]
        %v819 = vld [vmem:[%s1 + $0x3a8] sm:$0xff]
        %v820 = vld [vmem:[%s1 + $0x3b0] sm:$0xff]
        %v821 = vld [vmem:[%s1 + $0x3b8] sm:$0xff]
        %v822 = vld [vmem:[%s1 + $0x3c0] sm:$0xff]
        %v823 = vld [vmem:[%s1 + $0x3c8] sm:$0xff]
        %v824 = vld [vmem:[%s1 + $0x3d0] sm:$0xff]
        %v825 = vld [vmem:[%s1 + $0x3d8] sm:$0xff]
        %v826 = vld [vmem:[%s1 + $0x3e0] sm:$0xff]
        %v827 = vld [vmem:[%s1 + $0x3e8] sm:$0xff]
        %v828 = vld [vmem:[%s1 + $0x3f0] sm:$0xff]
        %v829 = vld [vmem:[%s1 + $0x3f8] sm:$0xff]
        %v830 = vld [vmem:[%s1 + $0x400] sm:$0xff]
        %v831 = vld [vmem:[%s1 + $0x408] sm:$0xff]
        %v832 = vld [vmem:[%s1 + $0x410] sm:$0xff]
        %v833 = vld [vmem:[%s1 + $0x418] sm:$0xff]
        %v834 = vld [vmem:[%s1 + $0x420] sm:$0xff]
        %v835 = vld [vmem:[%s1 + $0x428] sm:$0xff]
        %v836 = vld [vmem:[%s1 + $0x430] sm:$0xff]
        %v837 = vld [vmem:[%s1 + $0x438] sm:$0xff]
        %v838 = vld [vmem:[%s1 + $0x440] sm:$0xff]
        %v839 = vld [vmem:[%s1 + $0x448] sm:$0xff]
        %v840 = vld [vmem:[%s1 + $0x450] sm:$0xff]
        %v841 = vld [vmem:[%s1 + $0x458] sm:$0xff]
        %v842 = vld [vmem:[%s1 + $0x460] sm:$0xff]
        %v843 = vld [vmem:[%s1 + $0x468] sm:$0xff]
        %v844 = vld [vmem:[%s1 + $0x470] sm:$0xff]
        %v845 = vld [vmem:[%s1 + $0x478] sm:$0xff]
        %v846 = vld [vmem:[%s1 + $0x480] sm:$0xff]
        %v847 = vld [vmem:[%s1 + $0x488] sm:$0xff]
        %v848 = vld [vmem:[%s1 + $0x490] sm:$0xff]
        %v849 = vld [vmem:[%s1 + $0x498] sm:$0xff]
        %v850 = vld [vmem:[%s1 + $0x4a0] sm:$0xff]
        %v851 = vld [vmem:[%s1 + $0x4a8] sm:$0xff]
        %v852 = vld [vmem:[%s1 + $0x4b0] sm:$0xff]
        %v853 = vld [vmem:[%s1 + $0x4b8] sm:$0xff]
        %v854 = vld [vmem:[%s1 + $0x4c0] sm:$0xff]
        %v855 = vld [vmem:[%s1 + $0x4c8] sm:$0xff]
        %v856 = vld [vmem:[%s1 + $0x4d0] sm:$0xff]
        %v857 = vld [vmem:[%s1 + $0x4d8] sm:$0xff]
        %v858 = vld [vmem:[%s1 + $0x4e0] sm:$0xff]
        %v859 = vld [vmem:[%s1 + $0x4e8] sm:$0xff]
        %v860 = vld [vmem:[%s1 + $0x4f0] sm:$0xff]
        %v861 = vld [vmem:[%s1 + $0x4f8] sm:$0xff]
        %v862 = vld [vmem:[%s1 + $0x500] sm:$0xff]
        %v863 = vld [vmem:[%s1 + $0x508] sm:$0xff]
        %v864 = vld [vmem:[%s1 + $0x510] sm:$0xff]
        %v865 = vld [vmem:[%s1 + $0x518] sm:$0xff]
        %v866 = vld [vmem:[%s1 + $0x520] sm:$0xff]
        %v867 = vld [vmem:[%s1 + $0x528] sm:$0xff]
        %v868 = vld [vmem:[%s1 + $0x530] sm:$0xff]
        %v869 = vld [vmem:[%s1 + $0x538] sm:$0xff]
        %v870 = vld [vmem:[%s1 + $0x540] sm:$0xff]
        %v871 = vld [vmem:[%s1 + $0x548] sm:$0xff]
        %v872 = vld [vmem:[%s1 + $0x550] sm:$0xff]
        %v873 = vld [vmem:[%s1 + $0x558] sm:$0xff]
        %v874 = vld [vmem:[%s1 + $0x560] sm:$0xff]
        %v875 = vld [vmem:[%s1 + $0x568] sm:$0xff]
        %v876 = vld [vmem:[%s1 + $0x570] sm:$0xff]
        %v877 = vld [vmem:[%s1 + $0x578] sm:$0xff]
        %v878 = vld [vmem:[%s1 + $0x580] sm:$0xff]
        %v879 = vld [vmem:[%s1 + $0x588] sm:$0xff]
        %v880 = vld [vmem:[%s1 + $0x590] sm:$0xff]
        %v881 = vld [vmem:[%s1 + $0x598] sm:$0xff]
        %v882 = vld [vmem:[%s1 + $0x5a0] sm:$0xff]
        %v883 = vld [vmem:[%s1 + $0x5a8] sm:$0xff]
        %v884 = vld [vmem:[%s1 + $0x5b0] sm:$0xff]
        %v885 = vld [vmem:[%s1 + $0x5b8] sm:$0xff]
        %v886 = vld [vmem:[%s1 + $0x5c0] sm:$0xff]
        %v887 = vld [vmem:[%s1 + $0x5c8] sm:$0xff]
        %v888 = vld [vmem:[%s1 + $0x5d0] sm:$0xff]
        %v889 = vld [vmem:[%s1 + $0x5d8] sm:$0xff]
        %v890 = vld [vmem:[%s1 + $0x5e0] sm:$0xff]
        %v891 = vld [vmem:[%s1 + $0x5e8] sm:$0xff]
        %v892 = vld [vmem:[%s1 + $0x5f0] sm:$0xff]
        %v893 = vld [vmem:[%s1 + $0x5f8] sm:$0xff]
        %v894 = vld [vmem:[%s1 + $0x600] sm:$0xff]
        %v895 = vld [vmem:[%s1 + $0x608] sm:$0xff]
        %v896 = vld [vmem:[%s1 + $0x610] sm:$0xff]
        %v897 = vld [vmem:[%s1 + $0x618] sm:$0xff]
        %v898 = vld [vmem:[%s1 + $0x620] sm:$0xff]
        %v899 = vld [vmem:[%s1 + $0x628] sm:$0xff]
        %v900 = vld [vmem:[%s1 + $0x630] sm:$0xff]
        %v901 = vld [vmem:[%s1 + $0x638] sm:$0xff]
        %v902 = vld [vmem:[%s1 + $0x640] sm:$0xff]
        %v903 = vld [vmem:[%s1 + $0x648] sm:$0xff]
        %v904 = vld [vmem:[%s1 + $0x650] sm:$0xff]
        %v905 = vld [vmem:[%s1 + $0x658] sm:$0xff]
        %v906 = vld [vmem:[%s1 + $0x660] sm:$0xff]
        %v907 = vld [vmem:[%s1 + $0x668] sm:$0xff]
        %v908 = vld [vmem:[%s1 + $0x670] sm:$0xff]
        %v909 = vld [vmem:[%s1 + $0x678] sm:$0xff]
        %v910 = vld [vmem:[%s1 + $0x680] sm:$0xff]
        %v911 = vld [vmem:[%s1 + $0x688] sm:$0xff]
        %v912 = vld [vmem:[%s1 + $0x690] sm:$0xff]
        %v913 = vld [vmem:[%s1 + $0x698] sm:$0xff]
        %v914 = vld [vmem:[%s1 + $0x6a0] sm:$0xff]
        %v915 = vld [vmem:[%s1 + $0x6a8] sm:$0xff]
        %v916 = vld [vmem:[%s1 + $0x6b0] sm:$0xff]
        %v917 = vld [vmem:[%s1 + $0x6b8] sm:$0xff]
        %v918 = vld [vmem:[%s1 + $0x6c0] sm:$0xff]
        %v919 = vld [vmem:[%s1 + $0x6c8] sm:$0xff]
        %v920 = vld [vmem:[%s1 + $0x6d0] sm:$0xff]
        %v921 = vld [vmem:[%s1 + $0x6d8] sm:$0xff]
        %v922 = vld [vmem:[%s1 + $0x6e0] sm:$0xff]
        %v923 = vld [vmem:[%s1 + $0x6e8] sm:$0xff]
        %v924 = vld [vmem:[%s1 + $0x6f0] sm:$0xff]
        %v925 = vld [vmem:[%s1 + $0x6f8] sm:$0xff]
        %v926 = vld [vmem:[%s1 + $0x700] sm:$0xff]
        %v927 = vld [vmem:[%s1 + $0x708] sm:$0xff]
        %v928 = vld [vmem:[%s1 + $0x710] sm:$0xff]
        %v929 = vld [vmem:[%s1 + $0x718] sm:$0xff]
        %v930 = vld [vmem:[%s1 + $0x720] sm:$0xff]
        %v931 = vld [vmem:[%s1 + $0x728] sm:$0xff]
        %v932 = vld [vmem:[%s1 + $0x730] sm:$0xff]
        %v933 = vld [vmem:[%s1 + $0x738] sm:$0xff]
        %v934 = vld [vmem:[%s1 + $0x740] sm:$0xff]
        %v935 = vld [vmem:[%s1 + $0x748] sm:$0xff]
        %v936 = vld [vmem:[%s1 + $0x750] sm:$0xff]
        %v937 = vld [vmem:[%s1 + $0x758] sm:$0xff]
        %v938 = vld [vmem:[%s1 + $0x760] sm:$0xff]
        %v939 = vld [vmem:[%s1 + $0x768] sm:$0xff]
        %v940 = vld [vmem:[%s1 + $0x770] sm:$0xff]
        %v941 = vld [vmem:[%s1 + $0x778] sm:$0xff]
        %v942 = vld [vmem:[%s1 + $0x780] sm:$0xff]
        %v943 = vld [vmem:[%s1 + $0x788] sm:$0xff]
        %v944 = vld [vmem:[%s1 + $0x790] sm:$0xff]
        %v945 = vld [vmem:[%s1 + $0x798] sm:$0xff]
        %v946 = vld [vmem:[%s1 + $0x7a0] sm:$0xff]
        %v947 = vld [vmem:[%s1 + $0x7a8] sm:$0xff]
        %v948 = vld [vmem:[%s1 + $0x7b0] sm:$0xff]
        %v949 = vld [vmem:[%s1 + $0x7b8] sm:$0xff]
        %v950 = vld [vmem:[%s1 + $0x7c0] sm:$0xff]
        %v951 = vld [vmem:[%s1 + $0x7c8] sm:$0xff]
        %v952 = vld [vmem:[%s1 + $0x7d0] sm:$0xff]
        %v953 = vld [vmem:[%s1 + $0x7d8] sm:$0xff]
        %v954 = vld [vmem:[%s1 + $0x7e0] sm:$0xff]
        %v955 = vld [vmem:[%s1 + $0x7e8] sm:$0xff]
        %v956 = vld [vmem:[%s1 + $0x7f0] sm:$0xff]
        %v957 = vld [vmem:[%s1 + $0x7f8] sm:$0xff]
        %v958 = vld [vmem:[%s1 + $0x800] sm:$0xff]
        %v959 = vld [vmem:[%s1 + $0x808] sm:$0xff]
        %v960 = vld [vmem:[%s1 + $0x810] sm:$0xff]
        %v961 = vld [vmem:[%s1 + $0x818] sm:$0xff]
        %v962 = vld [vmem:[%s1 + $0x820] sm:$0xff]
        %v963 = vld [vmem:[%s1 + $0x828] sm:$0xff]
        %v964 = vld [vmem:[%s1 + $0x830] sm:$0xff]
        %v965 = vld [vmem:[%s1 + $0x838] sm:$0xff]
        %v966 = vld [vmem:[%s1 + $0x840] sm:$0xff]
        %v967 = vld [vmem:[%s1 + $0x848] sm:$0xff]
        %v968 = vld [vmem:[%s1 + $0x850] sm:$0xff]
        %v969 = vld [vmem:[%s1 + $0x858] sm:$0xff]
        %v970 = vld [vmem:[%s1 + $0x860] sm:$0xff]
        %v971 = vld [vmem:[%s1 + $0x868] sm:$0xff]
        %v972 = vld [vmem:[%s1 + $0x870] sm:$0xff]
        %v973 = vld [vmem:[%s1 + $0x878] sm:$0xff]
        %v974 = vld [vmem:[%s1 + $0x880] sm:$0xff]
        %v975 = vld [vmem:[%s1 + $0x888] sm:$0xff]
        %v976 = vld [vmem:[%s1 + $0x890] sm:$0xff]
        %v977 = vld [vmem:[%s1 + $0x898] sm:$0xff]
        %v978 = vld [vmem:[%s1 + $0x8a0] sm:$0xff]
        %v979 = vld [vmem:[%s1 + $0x8a8] sm:$0xff]
        %v980 = vld [vmem:[%s1 + $0x8b0] sm:$0xff]
        %v981 = vld [vmem:[%s1 + $0x8b8] sm:$0xff]
        %v982 = vld [vmem:[%s1 + $0x8c0] sm:$0xff]
        %v983 = vld [vmem:[%s1 + $0x8c8] sm:$0xff]
        %v984 = vld [vmem:[%s1 + $0x8d0] sm:$0xff]
        %v985 = vld [vmem:[%s1 + $0x8d8] sm:$0xff]
        %v986 = vld [vmem:[%s1 + $0x8e0] sm:$0xff]
        %v987 = vld [vmem:[%s1 + $0x8e8] sm:$0xff]
        %v988 = vld [vmem:[%s1 + $0x8f0] sm:$0xff]
        %v989 = vld [vmem:[%s1 + $0x8f8] sm:$0xff]
        %v990 = vld [vmem:[%s1 + $0x900] sm:$0xff]
        %v991 = vld [vmem:[%s1 + $0x908] sm:$0xff]
        %v992 = vld [vmem:[%s1 + $0x910] sm:$0xff]
        %v993 = vld [vmem:[%s1 + $0x918] sm:$0xff]
        %v994 = vld [vmem:[%s1 + $0x920] sm:$0xff]
        %v995 = vld [vmem:[%s1 + $0x928] sm:$0xff]
        %v996 = vld [vmem:[%s1 + $0x930] sm:$0xff]
        %v997 = vld [vmem:[%s1 + $0x938] sm:$0xff]
        %v998 = vld [vmem:[%s1 + $0x940] sm:$0xff]
        %v999 = vld [vmem:[%s1 + $0x948] sm:$0xff]
        %v1000 = vld [vmem:[%s1 + $0x950] sm:$0xff]
        %v1001 = vld [vmem:[%s1 + $0x958] sm:$0xff]
        %v1002 = vld [vmem:[%s1 + $0x960] sm:$0xff]
        %v1003 = vld [vmem:[%s1 + $0x968] sm:$0xff]
        %v1004 = vld [vmem:[%s1 + $0x970] sm:$0xff]
        %v1005 = vld [vmem:[%s1 + $0x978] sm:$0xff]
        %v1006 = vld [vmem:[%s1 + $0x980] sm:$0xff]
        %v1007 = vld [vmem:[%s1 + $0x988] sm:$0xff]
        %v1008 = vld [vmem:[%s1 + $0x990] sm:$0xff]
        %v1009 = vld [vmem:[%s1 + $0x998] sm:$0xff]
        %v1010 = vld [vmem:[%s1 + $0x9a0] sm:$0xff]
        %v1011 = vld [vmem:[%s1 + $0x9a8] sm:$0xff]
        %v1012 = vld [vmem:[%s1 + $0x9b0] sm:$0xff]
        %v1013 = vld [vmem:[%s1 + $0x9b8] sm:$0xff]
        %v1014 = vld [vmem:[%s1 + $0x9c0] sm:$0xff]
        %v1015 = vld [vmem:[%s1 + $0x9c8] sm:$0xff]
        %v1016 = vld [vmem:[%s1 + $0x9d0] sm:$0xff]
        %v1017 = vld [vmem:[%s1 + $0x9d8] sm:$0xff]
        %v1018 = vld [vmem:[%s1 + $0x9e0] sm:$0xff]
        %v1019 = vld [vmem:[%s1 + $0x9e8] sm:$0xff]
        %v1020 = vld [vmem:[%s1 + $0x9f0] sm:$0xff]
        %v1021 = vld [vmem:[%s1 + $0x9f8] sm:$0xff]
        %v1022 = vld [vmem:[%s2] sm:$0xf]
        %v1343 = vunpack.c.l.b16 %v702
        %v1344 = vunpack.c.h.b16 %v702
        %v1345 = vunpack.c.l.b16 %v703
        %v1346 = vunpack.c.h.b16 %v703
        %v1347 = vunpack.c.l.b16 %v704
        %v1348 = vunpack.c.h.b16 %v704
        %v1349 = vunpack.c.l.b16 %v705
        %v1350 = vunpack.c.h.b16 %v705
        %v1351 = vunpack.c.l.b16 %v706
        %v1352 = vunpack.c.h.b16 %v706
        %v1353 = vunpack.c.l.b16 %v707
        %v1354 = vunpack.c.h.b16 %v707
        %v1355 = vunpack.c.l.b16 %v708
        %v1356 = vunpack.c.h.b16 %v708
        %v1357 = vunpack.c.l.b16 %v709
        %v1358 = vunpack.c.h.b16 %v709
        %v1359 = vunpack.c.l.b16 %v710
        %v1360 = vunpack.c.h.b16 %v710
        %v1361 = vunpack.c.l.b16 %v711
        %v1362 = vunpack.c.h.b16 %v711
        %v1363 = vunpack.c.l.b16 %v712
        %v1364 = vunpack.c.h.b16 %v712
        %v1365 = vunpack.c.l.b16 %v713
        %v1366 = vunpack.c.h.b16 %v713
        %v1367 = vunpack.c.l.b16 %v714
        %v1368 = vunpack.c.h.b16 %v714
        %v1369 = vunpack.c.l.b16 %v715
        %v1370 = vunpack.c.h.b16 %v715
        %v1371 = vunpack.c.l.b16 %v716
        %v1372 = vunpack.c.h.b16 %v716
        %v1373 = vunpack.c.l.b16 %v717
        %v1374 = vunpack.c.h.b16 %v717
        %v1375 = vunpack.c.l.b16 %v718
        %v1376 = vunpack.c.h.b16 %v718
        %v1377 = vunpack.c.l.b16 %v719
        %v1378 = vunpack.c.h.b16 %v719
        %v1379 = vunpack.c.l.b16 %v720
        %v1380 = vunpack.c.h.b16 %v720
        %v1381 = vunpack.c.l.b16 %v721
        %v1382 = vunpack.c.h.b16 %v721
        %v1383 = vunpack.c.l.b16 %v722
        %v1384 = vunpack.c.h.b16 %v722
        %v1385 = vunpack.c.l.b16 %v723
        %v1386 = vunpack.c.h.b16 %v723
        %v1387 = vunpack.c.l.b16 %v724
        %v1388 = vunpack.c.h.b16 %v724
        %v1389 = vunpack.c.l.b16 %v725
        %v1390 = vunpack.c.h.b16 %v725
        %v1391 = vunpack.c.l.b16 %v726
        %v1392 = vunpack.c.h.b16 %v726
        %v1393 = vunpack.c.l.b16 %v727
        %v1394 = vunpack.c.h.b16 %v727
        %v1395 = vunpack.c.l.b16 %v728
        %v1396 = vunpack.c.h.b16 %v728
        %v1397 = vunpack.c.l.b16 %v729
        %v1398 = vunpack.c.h.b16 %v729
        %v1399 = vunpack.c.l.b16 %v730
        %v1400 = vunpack.c.h.b16 %v730
        %v1401 = vunpack.c.l.b16 %v731
        %v1402 = vunpack.c.h.b16 %v731
        %v1403 = vunpack.c.l.b16 %v732
        %v1404 = vunpack.c.h.b16 %v732
        %v1405 = vunpack.c.l.b16 %v733
        %v1406 = vunpack.c.h.b16 %v733
        %v1407 = vunpack.c.l.b16 %v734
        %v1408 = vunpack.c.h.b16 %v734
        %v1409 = vunpack.c.l.b16 %v735
        %v1410 = vunpack.c.h.b16 %v735
        %v1411 = vunpack.c.l.b16 %v736
        %v1412 = vunpack.c.h.b16 %v736
        %v1413 = vunpack.c.l.b16 %v737
        %v1414 = vunpack.c.h.b16 %v737
        %v1415 = vunpack.c.l.b16 %v738
        %v1416 = vunpack.c.h.b16 %v738
        %v1417 = vunpack.c.l.b16 %v739
        %v1418 = vunpack.c.h.b16 %v739
        %v1419 = vunpack.c.l.b16 %v740
        %v1420 = vunpack.c.h.b16 %v740
        %v1421 = vunpack.c.l.b16 %v741
        %v1422 = vunpack.c.h.b16 %v741
        %v1423 = vunpack.c.l.b16 %v742
        %v1424 = vunpack.c.h.b16 %v742
        %v1425 = vunpack.c.l.b16 %v743
        %v1426 = vunpack.c.h.b16 %v743
        %v1427 = vunpack.c.l.b16 %v744
        %v1428 = vunpack.c.h.b16 %v744
        %v1429 = vunpack.c.l.b16 %v745
        %v1430 = vunpack.c.h.b16 %v745
        %v1431 = vunpack.c.l.b16 %v746
        %v1432 = vunpack.c.h.b16 %v746
        %v1433 = vunpack.c.l.b16 %v747
        %v1434 = vunpack.c.h.b16 %v747
        %v1435 = vunpack.c.l.b16 %v748
        %v1436 = vunpack.c.h.b16 %v748
        %v1437 = vunpack.c.l.b16 %v749
        %v1438 = vunpack.c.h.b16 %v749
        %v1439 = vunpack.c.l.b16 %v750
        %v1440 = vunpack.c.h.b16 %v750
        %v1441 = vunpack.c.l.b16 %v751
        %v1442 = vunpack.c.h.b16 %v751
        %v1443 = vunpack.c.l.b16 %v752
        %v1444 = vunpack.c.h.b16 %v752
        %v1445 = vunpack.c.l.b16 %v753
        %v1446 = vunpack.c.h.b16 %v753
        %v1447 = vunpack.c.l.b16 %v754
        %v1448 = vunpack.c.h.b16 %v754
        %v1449 = vunpack.c.l.b16 %v755
        %v1450 = vunpack.c.h.b16 %v755
        %v1451 = vunpack.c.l.b16 %v756
        %v1452 = vunpack.c.h.b16 %v756
        %v1453 = vunpack.c.l.b16 %v757
        %v1454 = vunpack.c.h.b16 %v757
        %v1455 = vunpack.c.l.b16 %v758
        %v1456 = vunpack.c.h.b16 %v758
        %v1457 = vunpack.c.l.b16 %v759
        %v1458 = vunpack.c.h.b16 %v759
        %v1459 = vunpack.c.l.b16 %v760
        %v1460 = vunpack.c.h.b16 %v760
        %v1461 = vunpack.c.l.b16 %v761
        %v1462 = vunpack.c.h.b16 %v761
        %v1463 = vunpack.c.l.b16 %v762
        %v1464 = vunpack.c.h.b16 %v762
        %v1465 = vunpack.c.l.b16 %v763
        %v1466 = vunpack.c.h.b16 %v763
        %v1467 = vunpack.c.l.b16 %v764
        %v1468 = vunpack.c.h.b16 %v764
        %v1469 = vunpack.c.l.b16 %v765
        %v1470 = vunpack.c.h.b16 %v765
        %v1471 = vunpack.c.l.b16 %v766
        %v1472 = vunpack.c.h.b16 %v766
        %v1473 = vunpack.c.l.b16 %v767
        %v1474 = vunpack.c.h.b16 %v767
        %v1475 = vunpack.c.l.b16 %v768
        %v1476 = vunpack.c.h.b16 %v768
        %v1477 = vunpack.c.l.b16 %v769
        %v1478 = vunpack.c.h.b16 %v769
        %v1479 = vunpack.c.l.b16 %v770
        %v1480 = vunpack.c.h.b16 %v770
        %v1481 = vunpack.c.l.b16 %v771
        %v1482 = vunpack.c.h.b16 %v771
        %v1483 = vunpack.c.l.b16 %v772
        %v1484 = vunpack.c.h.b16 %v772
        %v1485 = vunpack.c.l.b16 %v773
        %v1486 = vunpack.c.h.b16 %v773
        %v1487 = vunpack.c.l.b16 %v774
        %v1488 = vunpack.c.h.b16 %v774
        %v1489 = vunpack.c.l.b16 %v775
        %v1490 = vunpack.c.h.b16 %v775
        %v1491 = vunpack.c.l.b16 %v776
        %v1492 = vunpack.c.h.b16 %v776
        %v1493 = vunpack.c.l.b16 %v777
        %v1494 = vunpack.c.h.b16 %v777
        %v1495 = vunpack.c.l.b16 %v778
        %v1496 = vunpack.c.h.b16 %v778
        %v1497 = vunpack.c.l.b16 %v779
        %v1498 = vunpack.c.h.b16 %v779
        %v1499 = vunpack.c.l.b16 %v780
        %v1500 = vunpack.c.h.b16 %v780
        %v1501 = vunpack.c.l.b16 %v781
        %v1502 = vunpack.c.h.b16 %v781
        %v1503 = vunpack.c.l.b16 %v782
        %v1504 = vunpack.c.h.b16 %v782
        %v1505 = vunpack.c.l.b16 %v783
        %v1506 = vunpack.c.h.b16 %v783
        %v1507 = vunpack.c.l.b16 %v784
        %v1508 = vunpack.c.h.b16 %v784
        %v1509 = vunpack.c.l.b16 %v785
        %v1510 = vunpack.c.h.b16 %v785
        %v1511 = vunpack.c.l.b16 %v786
        %v1512 = vunpack.c.h.b16 %v786
        %v1513 = vunpack.c.l.b16 %v787
        %v1514 = vunpack.c.h.b16 %v787
        %v1515 = vunpack.c.l.b16 %v788
        %v1516 = vunpack.c.h.b16 %v788
        %v1517 = vunpack.c.l.b16 %v789
        %v1518 = vunpack.c.h.b16 %v789
        %v1519 = vunpack.c.l.b16 %v790
        %v1520 = vunpack.c.h.b16 %v790
        %v1521 = vunpack.c.l.b16 %v791
        %v1522 = vunpack.c.h.b16 %v791
        %v1523 = vunpack.c.l.b16 %v792
        %v1524 = vunpack.c.h.b16 %v792
        %v1525 = vunpack.c.l.b16 %v793
        %v1526 = vunpack.c.h.b16 %v793
        %v1527 = vunpack.c.l.b16 %v794
        %v1528 = vunpack.c.h.b16 %v794
        %v1529 = vunpack.c.l.b16 %v795
        %v1530 = vunpack.c.h.b16 %v795
        %v1531 = vunpack.c.l.b16 %v796
        %v1532 = vunpack.c.h.b16 %v796
        %v1533 = vunpack.c.l.b16 %v797
        %v1534 = vunpack.c.h.b16 %v797
        %v1535 = vunpack.c.l.b16 %v798
        %v1536 = vunpack.c.h.b16 %v798
        %v1537 = vunpack.c.l.b16 %v799
        %v1538 = vunpack.c.h.b16 %v799
        %v1539 = vunpack.c.l.b16 %v800
        %v1540 = vunpack.c.h.b16 %v800
        %v1541 = vunpack.c.l.b16 %v801
        %v1542 = vunpack.c.h.b16 %v801
        %v1543 = vunpack.c.l.b16 %v802
        %v1544 = vunpack.c.h.b16 %v802
        %v1545 = vunpack.c.l.b16 %v803
        %v1546 = vunpack.c.h.b16 %v803
        %v1547 = vunpack.c.l.b16 %v804
        %v1548 = vunpack.c.h.b16 %v804
        %v1549 = vunpack.c.l.b16 %v805
        %v1550 = vunpack.c.h.b16 %v805
        %v1551 = vunpack.c.l.b16 %v806
        %v1552 = vunpack.c.h.b16 %v806
        %v1553 = vunpack.c.l.b16 %v807
        %v1554 = vunpack.c.h.b16 %v807
        %v1555 = vunpack.c.l.b16 %v808
        %v1556 = vunpack.c.h.b16 %v808
        %v1557 = vunpack.c.l.b16 %v809
        %v1558 = vunpack.c.h.b16 %v809
        %v1559 = vunpack.c.l.b16 %v810
        %v1560 = vunpack.c.h.b16 %v810
        %v1561 = vunpack.c.l.b16 %v811
        %v1562 = vunpack.c.h.b16 %v811
        %v1563 = vunpack.c.l.b16 %v812
        %v1564 = vunpack.c.h.b16 %v812
        %v1565 = vunpack.c.l.b16 %v813
        %v1566 = vunpack.c.h.b16 %v813
        %v1567 = vunpack.c.l.b16 %v814
        %v1568 = vunpack.c.h.b16 %v814
        %v1569 = vunpack.c.l.b16 %v815
        %v1570 = vunpack.c.h.b16 %v815
        %v1571 = vunpack.c.l.b16 %v816
        %v1572 = vunpack.c.h.b16 %v816
        %v1573 = vunpack.c.l.b16 %v817
        %v1574 = vunpack.c.h.b16 %v817
        %v1575 = vunpack.c.l.b16 %v818
        %v1576 = vunpack.c.h.b16 %v818
        %v1577 = vunpack.c.l.b16 %v819
        %v1578 = vunpack.c.h.b16 %v819
        %v1579 = vunpack.c.l.b16 %v820
        %v1580 = vunpack.c.h.b16 %v820
        %v1581 = vunpack.c.l.b16 %v821
        %v1582 = vunpack.c.h.b16 %v821
        %v1583 = vunpack.c.l.b16 %v822
        %v1584 = vunpack.c.h.b16 %v822
        %v1585 = vunpack.c.l.b16 %v823
        %v1586 = vunpack.c.h.b16 %v823
        %v1587 = vunpack.c.l.b16 %v824
        %v1588 = vunpack.c.h.b16 %v824
        %v1589 = vunpack.c.l.b16 %v825
        %v1590 = vunpack.c.h.b16 %v825
        %v1591 = vunpack.c.l.b16 %v826
        %v1592 = vunpack.c.h.b16 %v826
        %v1593 = vunpack.c.l.b16 %v827
        %v1594 = vunpack.c.h.b16 %v827
        %v1595 = vunpack.c.l.b16 %v828
        %v1596 = vunpack.c.h.b16 %v828
        %v1597 = vunpack.c.l.b16 %v829
        %v1598 = vunpack.c.h.b16 %v829
        %v1599 = vunpack.c.l.b16 %v830
        %v1600 = vunpack.c.h.b16 %v830
        %v1601 = vunpack.c.l.b16 %v831
        %v1602 = vunpack.c.h.b16 %v831
        %v1603 = vunpack.c.l.b16 %v832
        %v1604 = vunpack.c.h.b16 %v832
        %v1605 = vunpack.c.l.b16 %v833
        %v1606 = vunpack.c.h.b16 %v833
        %v1607 = vunpack.c.l.b16 %v834
        %v1608 = vunpack.c.h.b16 %v834
        %v1609 = vunpack.c.l.b16 %v835
        %v1610 = vunpack.c.h.b16 %v835
        %v1611 = vunpack.c.l.b16 %v836
        %v1612 = vunpack.c.h.b16 %v836
        %v1613 = vunpack.c.l.b16 %v837
        %v1614 = vunpack.c.h.b16 %v837
        %v1615 = vunpack.c.l.b16 %v838
        %v1616 = vunpack.c.h.b16 %v838
        %v1617 = vunpack.c.l.b16 %v839
        %v1618 = vunpack.c.h.b16 %v839
        %v1619 = vunpack.c.l.b16 %v840
        %v1620 = vunpack.c.h.b16 %v840
        %v1621 = vunpack.c.l.b16 %v841
        %v1622 = vunpack.c.h.b16 %v841
        %v1623 = vunpack.c.l.b16 %v842
        %v1624 = vunpack.c.h.b16 %v842
        %v1625 = vunpack.c.l.b16 %v843
        %v1626 = vunpack.c.h.b16 %v843
        %v1627 = vunpack.c.l.b16 %v844
        %v1628 = vunpack.c.h.b16 %v844
        %v1629 = vunpack.c.l.b16 %v845
        %v1630 = vunpack.c.h.b16 %v845
        %v1631 = vunpack.c.l.b16 %v846
        %v1632 = vunpack.c.h.b16 %v846
        %v1633 = vunpack.c.l.b16 %v847
        %v1634 = vunpack.c.h.b16 %v847
        %v1635 = vunpack.c.l.b16 %v848
        %v1636 = vunpack.c.h.b16 %v848
        %v1637 = vunpack.c.l.b16 %v849
        %v1638 = vunpack.c.h.b16 %v849
        %v1639 = vunpack.c.l.b16 %v850
        %v1640 = vunpack.c.h.b16 %v850
        %v1641 = vunpack.c.l.b16 %v851
        %v1642 = vunpack.c.h.b16 %v851
        %v1643 = vunpack.c.l.b16 %v852
        %v1644 = vunpack.c.h.b16 %v852
        %v1645 = vunpack.c.l.b16 %v853
        %v1646 = vunpack.c.h.b16 %v853
        %v1647 = vunpack.c.l.b16 %v854
        %v1648 = vunpack.c.h.b16 %v854
        %v1649 = vunpack.c.l.b16 %v855
        %v1650 = vunpack.c.h.b16 %v855
        %v1651 = vunpack.c.l.b16 %v856
        %v1652 = vunpack.c.h.b16 %v856
        %v1653 = vunpack.c.l.b16 %v857
        %v1654 = vunpack.c.h.b16 %v857
        %v1655 = vunpack.c.l.b16 %v858
        %v1656 = vunpack.c.h.b16 %v858
        %v1657 = vunpack.c.l.b16 %v859
        %v1658 = vunpack.c.h.b16 %v859
        %v1659 = vunpack.c.l.b16 %v860
        %v1660 = vunpack.c.h.b16 %v860
        %v1661 = vunpack.c.l.b16 %v861
        %v1662 = vunpack.c.h.b16 %v861
        %v1663 = vunpack.c.l.b16 %v862
        %v1664 = vunpack.c.h.b16 %v862
        %v1665 = vunpack.c.l.b16 %v863
        %v1666 = vunpack.c.h.b16 %v863
        %v1667 = vunpack.c.l.b16 %v864
        %v1668 = vunpack.c.h.b16 %v864
        %v1669 = vunpack.c.l.b16 %v865
        %v1670 = vunpack.c.h.b16 %v865
        %v1671 = vunpack.c.l.b16 %v866
        %v1672 = vunpack.c.h.b16 %v866
        %v1673 = vunpack.c.l.b16 %v867
        %v1674 = vunpack.c.h.b16 %v867
        %v1675 = vunpack.c.l.b16 %v868
        %v1676 = vunpack.c.h.b16 %v868
        %v1677 = vunpack.c.l.b16 %v869
        %v1678 = vunpack.c.h.b16 %v869
        %v1679 = vunpack.c.l.b16 %v870
        %v1680 = vunpack.c.h.b16 %v870
        %v1681 = vunpack.c.l.b16 %v871
        %v1682 = vunpack.c.h.b16 %v871
        %v1683 = vunpack.c.l.b16 %v872
        %v1684 = vunpack.c.h.b16 %v872
        %v1685 = vunpack.c.l.b16 %v873
        %v1686 = vunpack.c.h.b16 %v873
        %v1687 = vunpack.c.l.b16 %v874
        %v1688 = vunpack.c.h.b16 %v874
        %v1689 = vunpack.c.l.b16 %v875
        %v1690 = vunpack.c.h.b16 %v875
        %v1691 = vunpack.c.l.b16 %v876
        %v1692 = vunpack.c.h.b16 %v876
        %v1693 = vunpack.c.l.b16 %v877
        %v1694 = vunpack.c.h.b16 %v877
        %v1695 = vunpack.c.l.b16 %v878
        %v1696 = vunpack.c.h.b16 %v878
        %v1697 = vunpack.c.l.b16 %v879
        %v1698 = vunpack.c.h.b16 %v879
        %v1699 = vunpack.c.l.b16 %v880
        %v1700 = vunpack.c.h.b16 %v880
        %v1701 = vunpack.c.l.b16 %v881
        %v1702 = vunpack.c.h.b16 %v881
        %v1703 = vunpack.c.l.b16 %v882
        %v1704 = vunpack.c.h.b16 %v882
        %v1705 = vunpack.c.l.b16 %v883
        %v1706 = vunpack.c.h.b16 %v883
        %v1707 = vunpack.c.l.b16 %v884
        %v1708 = vunpack.c.h.b16 %v884
        %v1709 = vunpack.c.l.b16 %v885
        %v1710 = vunpack.c.h.b16 %v885
        %v1711 = vunpack.c.l.b16 %v886
        %v1712 = vunpack.c.h.b16 %v886
        %v1713 = vunpack.c.l.b16 %v887
        %v1714 = vunpack.c.h.b16 %v887
        %v1715 = vunpack.c.l.b16 %v888
        %v1716 = vunpack.c.h.b16 %v888
        %v1717 = vunpack.c.l.b16 %v889
        %v1718 = vunpack.c.h.b16 %v889
        %v1719 = vunpack.c.l.b16 %v890
        %v1720 = vunpack.c.h.b16 %v890
        %v1721 = vunpack.c.l.b16 %v891
        %v1722 = vunpack.c.h.b16 %v891
        %v1723 = vunpack.c.l.b16 %v892
        %v1724 = vunpack.c.h.b16 %v892
        %v1725 = vunpack.c.l.b16 %v893
        %v1726 = vunpack.c.h.b16 %v893
        %v1727 = vunpack.c.l.b16 %v894
        %v1728 = vunpack.c.h.b16 %v894
        %v1729 = vunpack.c.l.b16 %v895
        %v1730 = vunpack.c.h.b16 %v895
        %v1731 = vunpack.c.l.b16 %v896
        %v1732 = vunpack.c.h.b16 %v896
        %v1733 = vunpack.c.l.b16 %v897
        %v1734 = vunpack.c.h.b16 %v897
        %v1735 = vunpack.c.l.b16 %v898
        %v1736 = vunpack.c.h.b16 %v898
        %v1737 = vunpack.c.l.b16 %v899
        %v1738 = vunpack.c.h.b16 %v899
        %v1739 = vunpack.c.l.b16 %v900
        %v1740 = vunpack.c.h.b16 %v900
        %v1741 = vunpack.c.l.b16 %v901
        %v1742 = vunpack.c.h.b16 %v901
        %v1743 = vunpack.c.l.b16 %v902
        %v1744 = vunpack.c.h.b16 %v902
        %v1745 = vunpack.c.l.b16 %v903
        %v1746 = vunpack.c.h.b16 %v903
        %v1747 = vunpack.c.l.b16 %v904
        %v1748 = vunpack.c.h.b16 %v904
        %v1749 = vunpack.c.l.b16 %v905
        %v1750 = vunpack.c.h.b16 %v905
        %v1751 = vunpack.c.l.b16 %v906
        %v1752 = vunpack.c.h.b16 %v906
        %v1753 = vunpack.c.l.b16 %v907
        %v1754 = vunpack.c.h.b16 %v907
        %v1755 = vunpack.c.l.b16 %v908
        %v1756 = vunpack.c.h.b16 %v908
        %v1757 = vunpack.c.l.b16 %v909
        %v1758 = vunpack.c.h.b16 %v909
        %v1759 = vunpack.c.l.b16 %v910
        %v1760 = vunpack.c.h.b16 %v910
        %v1761 = vunpack.c.l.b16 %v911
        %v1762 = vunpack.c.h.b16 %v911
        %v1763 = vunpack.c.l.b16 %v912
        %v1764 = vunpack.c.h.b16 %v912
        %v1765 = vunpack.c.l.b16 %v913
        %v1766 = vunpack.c.h.b16 %v913
        %v1767 = vunpack.c.l.b16 %v914
        %v1768 = vunpack.c.h.b16 %v914
        %v1769 = vunpack.c.l.b16 %v915
        %v1770 = vunpack.c.h.b16 %v915
        %v1771 = vunpack.c.l.b16 %v916
        %v1772 = vunpack.c.h.b16 %v916
        %v1773 = vunpack.c.l.b16 %v917
        %v1774 = vunpack.c.h.b16 %v917
        %v1775 = vunpack.c.l.b16 %v918
        %v1776 = vunpack.c.h.b16 %v918
        %v1777 = vunpack.c.l.b16 %v919
        %v1778 = vunpack.c.h.b16 %v919
        %v1779 = vunpack.c.l.b16 %v920
        %v1780 = vunpack.c.h.b16 %v920
        %v1781 = vunpack.c.l.b16 %v921
        %v1782 = vunpack.c.h.b16 %v921
        %v1783 = vunpack.c.l.b16 %v922
        %v1784 = vunpack.c.h.b16 %v922
        %v1785 = vunpack.c.l.b16 %v923
        %v1786 = vunpack.c.h.b16 %v923
        %v1787 = vunpack.c.l.b16 %v924
        %v1788 = vunpack.c.h.b16 %v924
        %v1789 = vunpack.c.l.b16 %v925
        %v1790 = vunpack.c.h.b16 %v925
        %v1791 = vunpack.c.l.b16 %v926
        %v1792 = vunpack.c.h.b16 %v926
        %v1793 = vunpack.c.l.b16 %v927
        %v1794 = vunpack.c.h.b16 %v927
        %v1795 = vunpack.c.l.b16 %v928
        %v1796 = vunpack.c.h.b16 %v928
        %v1797 = vunpack.c.l.b16 %v929
        %v1798 = vunpack.c.h.b16 %v929
        %v1799 = vunpack.c.l.b16 %v930
        %v1800 = vunpack.c.h.b16 %v930
        %v1801 = vunpack.c.l.b16 %v931
        %v1802 = vunpack.c.h.b16 %v931
        %v1803 = vunpack.c.l.b16 %v932
        %v1804 = vunpack.c.h.b16 %v932
        %v1805 = vunpack.c.l.b16 %v933
        %v1806 = vunpack.c.h.b16 %v933
        %v1807 = vunpack.c.l.b16 %v934
        %v1808 = vunpack.c.h.b16 %v934
        %v1809 = vunpack.c.l.b16 %v935
        %v1810 = vunpack.c.h.b16 %v935
        %v1811 = vunpack.c.l.b16 %v936
        %v1812 = vunpack.c.h.b16 %v936
        %v1813 = vunpack.c.l.b16 %v937
        %v1814 = vunpack.c.h.b16 %v937
        %v1815 = vunpack.c.l.b16 %v938
        %v1816 = vunpack.c.h.b16 %v938
        %v1817 = vunpack.c.l.b16 %v939
        %v1818 = vunpack.c.h.b16 %v939
        %v1819 = vunpack.c.l.b16 %v940
        %v1820 = vunpack.c.h.b16 %v940
        %v1821 = vunpack.c.l.b16 %v941
        %v1822 = vunpack.c.h.b16 %v941
        %v1823 = vunpack.c.l.b16 %v942
        %v1824 = vunpack.c.h.b16 %v942
        %v1825 = vunpack.c.l.b16 %v943
        %v1826 = vunpack.c.h.b16 %v943
        %v1827 = vunpack.c.l.b16 %v944
        %v1828 = vunpack.c.h.b16 %v944
        %v1829 = vunpack.c.l.b16 %v945
        %v1830 = vunpack.c.h.b16 %v945
        %v1831 = vunpack.c.l.b16 %v946
        %v1832 = vunpack.c.h.b16 %v946
        %v1833 = vunpack.c.l.b16 %v947
        %v1834 = vunpack.c.h.b16 %v947
        %v1835 = vunpack.c.l.b16 %v948
        %v1836 = vunpack.c.h.b16 %v948
        %v1837 = vunpack.c.l.b16 %v949
        %v1838 = vunpack.c.h.b16 %v949
        %v1839 = vunpack.c.l.b16 %v950
        %v1840 = vunpack.c.h.b16 %v950
        %v1841 = vunpack.c.l.b16 %v951
        %v1842 = vunpack.c.h.b16 %v951
        %v1843 = vunpack.c.l.b16 %v952
        %v1844 = vunpack.c.h.b16 %v952
        %v1845 = vunpack.c.l.b16 %v953
        %v1846 = vunpack.c.h.b16 %v953
        %v1847 = vunpack.c.l.b16 %v954
        %v1848 = vunpack.c.h.b16 %v954
        %v1849 = vunpack.c.l.b16 %v955
        %v1850 = vunpack.c.h.b16 %v955
        %v1851 = vunpack.c.l.b16 %v956
        %v1852 = vunpack.c.h.b16 %v956
        %v1853 = vunpack.c.l.b16 %v957
        %v1854 = vunpack.c.h.b16 %v957
        %v1855 = vunpack.c.l.b16 %v958
        %v1856 = vunpack.c.h.b16 %v958
        %v1857 = vunpack.c.l.b16 %v959
        %v1858 = vunpack.c.h.b16 %v959
        %v1859 = vunpack.c.l.b16 %v960
        %v1860 = vunpack.c.h.b16 %v960
        %v1861 = vunpack.c.l.b16 %v961
        %v1862 = vunpack.c.h.b16 %v961
        %v1863 = vunpack.c.l.b16 %v962
        %v1864 = vunpack.c.h.b16 %v962
        %v1865 = vunpack.c.l.b16 %v963
        %v1866 = vunpack.c.h.b16 %v963
        %v1867 = vunpack.c.l.b16 %v964
        %v1868 = vunpack.c.h.b16 %v964
        %v1869 = vunpack.c.l.b16 %v965
        %v1870 = vunpack.c.h.b16 %v965
        %v1871 = vunpack.c.l.b16 %v966
        %v1872 = vunpack.c.h.b16 %v966
        %v1873 = vunpack.c.l.b16 %v967
        %v1874 = vunpack.c.h.b16 %v967
        %v1875 = vunpack.c.l.b16 %v968
        %v1876 = vunpack.c.h.b16 %v968
        %v1877 = vunpack.c.l.b16 %v969
        %v1878 = vunpack.c.h.b16 %v969
        %v1879 = vunpack.c.l.b16 %v970
        %v1880 = vunpack.c.h.b16 %v970
        %v1881 = vunpack.c.l.b16 %v971
        %v1882 = vunpack.c.h.b16 %v971
        %v1883 = vunpack.c.l.b16 %v972
        %v1884 = vunpack.c.h.b16 %v972
        %v1885 = vunpack.c.l.b16 %v973
        %v1886 = vunpack.c.h.b16 %v973
        %v1887 = vunpack.c.l.b16 %v974
        %v1888 = vunpack.c.h.b16 %v974
        %v1889 = vunpack.c.l.b16 %v975
        %v1890 = vunpack.c.h.b16 %v975
        %v1891 = vunpack.c.l.b16 %v976
        %v1892 = vunpack.c.h.b16 %v976
        %v1893 = vunpack.c.l.b16 %v977
        %v1894 = vunpack.c.h.b16 %v977
        %v1895 = vunpack.c.l.b16 %v978
        %v1896 = vunpack.c.h.b16 %v978
        %v1897 = vunpack.c.l.b16 %v979
        %v1898 = vunpack.c.h.b16 %v979
        %v1899 = vunpack.c.l.b16 %v980
        %v1900 = vunpack.c.h.b16 %v980
        %v1901 = vunpack.c.l.b16 %v981
        %v1902 = vunpack.c.h.b16 %v981
        %v1903 = vunpack.c.l.b16 %v982
        %v1904 = vunpack.c.h.b16 %v982
        %v1905 = vunpack.c.l.b16 %v983
        %v1906 = vunpack.c.h.b16 %v983
        %v1907 = vunpack.c.l.b16 %v984
        %v1908 = vunpack.c.h.b16 %v984
        %v1909 = vunpack.c.l.b16 %v985
        %v1910 = vunpack.c.h.b16 %v985
        %v1911 = vunpack.c.l.b16 %v986
        %v1912 = vunpack.c.h.b16 %v986
        %v1913 = vunpack.c.l.b16 %v987
        %v1914 = vunpack.c.h.b16 %v987
        %v1915 = vunpack.c.l.b16 %v988
        %v1916 = vunpack.c.h.b16 %v988
        %v1917 = vunpack.c.l.b16 %v989
        %v1918 = vunpack.c.h.b16 %v989
        %v1919 = vunpack.c.l.b16 %v990
        %v1920 = vunpack.c.h.b16 %v990
        %v1921 = vunpack.c.l.b16 %v991
        %v1922 = vunpack.c.h.b16 %v991
        %v1923 = vunpack.c.l.b16 %v992
        %v1924 = vunpack.c.h.b16 %v992
        %v1925 = vunpack.c.l.b16 %v993
        %v1926 = vunpack.c.h.b16 %v993
        %v1927 = vunpack.c.l.b16 %v994
        %v1928 = vunpack.c.h.b16 %v994
        %v1929 = vunpack.c.l.b16 %v995
        %v1930 = vunpack.c.h.b16 %v995
        %v1931 = vunpack.c.l.b16 %v996
        %v1932 = vunpack.c.h.b16 %v996
        %v1933 = vunpack.c.l.b16 %v997
        %v1934 = vunpack.c.h.b16 %v997
        %v1935 = vunpack.c.l.b16 %v998
        %v1936 = vunpack.c.h.b16 %v998
        %v1937 = vunpack.c.l.b16 %v999
        %v1938 = vunpack.c.h.b16 %v999
        %v1939 = vunpack.c.l.b16 %v1000
        %v1940 = vunpack.c.h.b16 %v1000
        %v1941 = vunpack.c.l.b16 %v1001
        %v1942 = vunpack.c.h.b16 %v1001
        %v1943 = vunpack.c.l.b16 %v1002
        %v1944 = vunpack.c.h.b16 %v1002
        %v1945 = vunpack.c.l.b16 %v1003
        %v1946 = vunpack.c.h.b16 %v1003
        %v1947 = vunpack.c.l.b16 %v1004
        %v1948 = vunpack.c.h.b16 %v1004
        %v1949 = vunpack.c.l.b16 %v1005
        %v1950 = vunpack.c.h.b16 %v1005
        %v1951 = vunpack.c.l.b16 %v1006
        %v1952 = vunpack.c.h.b16 %v1006
        %v1953 = vunpack.c.l.b16 %v1007
        %v1954 = vunpack.c.h.b16 %v1007
        %v1955 = vunpack.c.l.b16 %v1008
        %v1956 = vunpack.c.h.b16 %v1008
        %v1957 = vunpack.c.l.b16 %v1009
        %v1958 = vunpack.c.h.b16 %v1009
        %v1959 = vunpack.c.l.b16 %v1010
        %v1960 = vunpack.c.h.b16 %v1010
        %v1961 = vunpack.c.l.b16 %v1011
        %v1962 = vunpack.c.h.b16 %v1011
        %v1963 = vunpack.c.l.b16 %v1012
        %v1964 = vunpack.c.h.b16 %v1012
        %v1965 = vunpack.c.l.b16 %v1013
        %v1966 = vunpack.c.h.b16 %v1013
        %v1967 = vunpack.c.l.b16 %v1014
        %v1968 = vunpack.c.h.b16 %v1014
        %v1969 = vunpack.c.l.b16 %v1015
        %v1970 = vunpack.c.h.b16 %v1015
        %v1971 = vunpack.c.l.b16 %v1016
        %v1972 = vunpack.c.h.b16 %v1016
        %v1973 = vunpack.c.l.b16 %v1017
        %v1974 = vunpack.c.h.b16 %v1017
        %v1975 = vunpack.c.l.b16 %v1018
        %v1976 = vunpack.c.h.b16 %v1018
        %v1977 = vunpack.c.l.b16 %v1019
        %v1978 = vunpack.c.h.b16 %v1019
        %v1979 = vunpack.c.l.b16 %v1020
        %v1980 = vunpack.c.h.b16 %v1020
        %v1981 = vunpack.c.l.b16 %v1021
        %v1982 = vunpack.c.h.b16 %v1021
        %v1983 = vpack.c.b16 %v1347, %v1343
        %v1984 = vpack.c.b16 %v1348, %v1344
        %v1985 = vpack.c.b16 %v1349, %v1345
        %v1986 = vpack.c.b16 %v1350, %v1346
        %v1987 = vpack.c.b16 %v1355, %v1351
        %v1988 = vpack.c.b16 %v1356, %v1352
        %v1989 = vpack.c.b16 %v1357, %v1353
        %v1990 = vpack.c.b16 %v1358, %v1354
        %v1991 = vpack.c.b16 %v1363, %v1359
        %v1992 = vpack.c.b16 %v1364, %v1360
        %v1993 = vpack.c.b16 %v1365, %v1361
        %v1994 = vpack.c.b16 %v1366, %v1362
        %v1995 = vpack.c.b16 %v1371, %v1367
        %v1996 = vpack.c.b16 %v1372, %v1368
        %v1997 = vpack.c.b16 %v1373, %v1369
        %v1998 = vpack.c.b16 %v1374, %v1370
        %v1999 = vpack.c.b16 %v1379, %v1375
        %v2000 = vpack.c.b16 %v1380, %v1376
        %v2001 = vpack.c.b16 %v1381, %v1377
        %v2002 = vpack.c.b16 %v1382, %v1378
        %v2003 = vpack.c.b16 %v1387, %v1383
        %v2004 = vpack.c.b16 %v1388, %v1384
        %v2005 = vpack.c.b16 %v1389, %v1385
        %v2006 = vpack.c.b16 %v1390, %v1386
        %v2007 = vpack.c.b16 %v1395, %v1391
        %v2008 = vpack.c.b16 %v1396, %v1392
        %v2009 = vpack.c.b16 %v1397, %v1393
        %v2010 = vpack.c.b16 %v1398, %v1394
        %v2011 = vpack.c.b16 %v1403, %v1399
        %v2012 = vpack.c.b16 %v1404, %v1400
        %v2013 = vpack.c.b16 %v1405, %v1401
        %v2014 = vpack.c.b16 %v1406, %v1402
        %v2015 = vpack.c.b16 %v1411, %v1407
        %v2016 = vpack.c.b16 %v1412, %v1408
        %v2017 = vpack.c.b16 %v1413, %v1409
        %v2018 = vpack.c.b16 %v1414, %v1410
        %v2019 = vpack.c.b16 %v1419, %v1415
        %v2020 = vpack.c.b16 %v1420, %v1416
        %v2021 = vpack.c.b16 %v1421, %v1417
        %v2022 = vpack.c.b16 %v1422, %v1418
        %v2023 = vpack.c.b16 %v1427, %v1423
        %v2024 = vpack.c.b16 %v1428, %v1424
        %v2025 = vpack.c.b16 %v1429, %v1425
        %v2026 = vpack.c.b16 %v1430, %v1426
        %v2027 = vpack.c.b16 %v1435, %v1431
        %v2028 = vpack.c.b16 %v1436, %v1432
        %v2029 = vpack.c.b16 %v1437, %v1433
        %v2030 = vpack.c.b16 %v1438, %v1434
        %v2031 = vpack.c.b16 %v1443, %v1439
        %v2032 = vpack.c.b16 %v1444, %v1440
        %v2033 = vpack.c.b16 %v1445, %v1441
        %v2034 = vpack.c.b16 %v1446, %v1442
        %v2035 = vpack.c.b16 %v1451, %v1447
        %v2036 = vpack.c.b16 %v1452, %v1448
        %v2037 = vpack.c.b16 %v1453, %v1449
        %v2038 = vpack.c.b16 %v1454, %v1450
        %v2039 = vpack.c.b16 %v1459, %v1455
        %v2040 = vpack.c.b16 %v1460, %v1456
        %v2041 = vpack.c.b16 %v1461, %v1457
        %v2042 = vpack.c.b16 %v1462, %v1458
        %v2043 = vpack.c.b16 %v1467, %v1463
        %v2044 = vpack.c.b16 %v1468, %v1464
        %v2045 = vpack.c.b16 %v1469, %v1465
        %v2046 = vpack.c.b16 %v1470, %v1466
        %v2047 = vpack.c.b16 %v1475, %v1471
        %v2048 = vpack.c.b16 %v1476, %v1472
        %v2049 = vpack.c.b16 %v1477, %v1473
        %v2050 = vpack.c.b16 %v1478, %v1474
        %v2051 = vpack.c.b16 %v1483, %v1479
        %v2052 = vpack.c.b16 %v1484, %v1480
        %v2053 = vpack.c.b16 %v1485, %v1481
        %v2054 = vpack.c.b16 %v1486, %v1482
        %v2055 = vpack.c.b16 %v1491, %v1487
        %v2056 = vpack.c.b16 %v1492, %v1488
        %v2057 = vpack.c.b16 %v1493, %v1489
        %v2058 = vpack.c.b16 %v1494, %v1490
        %v2059 = vpack.c.b16 %v1499, %v1495
        %v2060 = vpack.c.b16 %v1500, %v1496
        %v2061 = vpack.c.b16 %v1501, %v1497
        %v2062 = vpack.c.b16 %v1502, %v1498
        %v2063 = vpack.c.b16 %v1507, %v1503
        %v2064 = vpack.c.b16 %v1508, %v1504
        %v2065 = vpack.c.b16 %v1509, %v1505
        %v2066 = vpack.c.b16 %v1510, %v1506
        %v2067 = vpack.c.b16 %v1515, %v1511
        %v2068 = vpack.c.b16 %v1516, %v1512
        %v2069 = vpack.c.b16 %v1517, %v1513
        %v2070 = vpack.c.b16 %v1518, %v1514
        %v2071 = vpack.c.b16 %v1523, %v1519
        %v2072 = vpack.c.b16 %v1524, %v1520
        %v2073 = vpack.c.b16 %v1525, %v1521
        %v2074 = vpack.c.b16 %v1526, %v1522
        %v2075 = vpack.c.b16 %v1531, %v1527
        %v2076 = vpack.c.b16 %v1532, %v1528
        %v2077 = vpack.c.b16 %v1533, %v1529
        %v2078 = vpack.c.b16 %v1534, %v1530
        %v2079 = vpack.c.b16 %v1539, %v1535
        %v2080 = vpack.c.b16 %v1540, %v1536
        %v2081 = vpack.c.b16 %v1541, %v1537
        %v2082 = vpack.c.b16 %v1542, %v1538
        %v2083 = vpack.c.b16 %v1547, %v1543
        %v2084 = vpack.c.b16 %v1548, %v1544
        %v2085 = vpack.c.b16 %v1549, %v1545
        %v2086 = vpack.c.b16 %v1550, %v1546
        %v2087 = vpack.c.b16 %v1555, %v1551
        %v2088 = vpack.c.b16 %v1556, %v1552
        %v2089 = vpack.c.b16 %v1557, %v1553
        %v2090 = vpack.c.b16 %v1558, %v1554
        %v2091 = vpack.c.b16 %v1563, %v1559
        %v2092 = vpack.c.b16 %v1564, %v1560
        %v2093 = vpack.c.b16 %v1565, %v1561
        %v2094 = vpack.c.b16 %v1566, %v1562
        %v2095 = vpack.c.b16 %v1571, %v1567
        %v2096 = vpack.c.b16 %v1572, %v1568
        %v2097 = vpack.c.b16 %v1573, %v1569
        %v2098 = vpack.c.b16 %v1574, %v1570
        %v2099 = vpack.c.b16 %v1579, %v1575
        %v2100 = vpack.c.b16 %v1580, %v1576
        %v2101 = vpack.c.b16 %v1581, %v1577
        %v2102 = vpack.c.b16 %v1582, %v1578
        %v2103 = vpack.c.b16 %v1587, %v1583
        %v2104 = vpack.c.b16 %v1588, %v1584
        %v2105 = vpack.c.b16 %v1589, %v1585
        %v2106 = vpack.c.b16 %v1590, %v1586
        %v2107 = vpack.c.b16 %v1595, %v1591
        %v2108 = vpack.c.b16 %v1596, %v1592
        %v2109 = vpack.c.b16 %v1597, %v1593
        %v2110 = vpack.c.b16 %v1598, %v1594
        %v2111 = vpack.c.b16 %v1603, %v1599
        %v2112 = vpack.c.b16 %v1604, %v1600
        %v2113 = vpack.c.b16 %v1605, %v1601
        %v2114 = vpack.c.b16 %v1606, %v1602
        %v2115 = vpack.c.b16 %v1611, %v1607
        %v2116 = vpack.c.b16 %v1612, %v1608
        %v2117 = vpack.c.b16 %v1613, %v1609
        %v2118 = vpack.c.b16 %v1614, %v1610
        %v2119 = vpack.c.b16 %v1619, %v1615
        %v2120 = vpack.c.b16 %v1620, %v1616
        %v2121 = vpack.c.b16 %v1621, %v1617
        %v2122 = vpack.c.b16 %v1622, %v1618
        %v2123 = vpack.c.b16 %v1627, %v1623
        %v2124 = vpack.c.b16 %v1628, %v1624
        %v2125 = vpack.c.b16 %v1629, %v1625
        %v2126 = vpack.c.b16 %v1630, %v1626
        %v2127 = vpack.c.b16 %v1635, %v1631
        %v2128 = vpack.c.b16 %v1636, %v1632
        %v2129 = vpack.c.b16 %v1637, %v1633
        %v2130 = vpack.c.b16 %v1638, %v1634
        %v2131 = vpack.c.b16 %v1643, %v1639
        %v2132 = vpack.c.b16 %v1644, %v1640
        %v2133 = vpack.c.b16 %v1645, %v1641
        %v2134 = vpack.c.b16 %v1646, %v1642
        %v2135 = vpack.c.b16 %v1651, %v1647
        %v2136 = vpack.c.b16 %v1652, %v1648
        %v2137 = vpack.c.b16 %v1653, %v1649
        %v2138 = vpack.c.b16 %v1654, %v1650
        %v2139 = vpack.c.b16 %v1659, %v1655
        %v2140 = vpack.c.b16 %v1660, %v1656
        %v2141 = vpack.c.b16 %v1661, %v1657
        %v2142 = vpack.c.b16 %v1662, %v1658
        %v2143 = vpack.c.b16 %v1667, %v1663
        %v2144 = vpack.c.b16 %v1668, %v1664
        %v2145 = vpack.c.b16 %v1669, %v1665
        %v2146 = vpack.c.b16 %v1670, %v1666
        %v2147 = vpack.c.b16 %v1675, %v1671
        %v2148 = vpack.c.b16 %v1676, %v1672
        %v2149 = vpack.c.b16 %v1677, %v1673
        %v2150 = vpack.c.b16 %v1678, %v1674
        %v2151 = vpack.c.b16 %v1683, %v1679
        %v2152 = vpack.c.b16 %v1684, %v1680
        %v2153 = vpack.c.b16 %v1685, %v1681
        %v2154 = vpack.c.b16 %v1686, %v1682
        %v2155 = vpack.c.b16 %v1691, %v1687
        %v2156 = vpack.c.b16 %v1692, %v1688
        %v2157 = vpack.c.b16 %v1693, %v1689
        %v2158 = vpack.c.b16 %v1694, %v1690
        %v2159 = vpack.c.b16 %v1699, %v1695
        %v2160 = vpack.c.b16 %v1700, %v1696
        %v2161 = vpack.c.b16 %v1701, %v1697
        %v2162 = vpack.c.b16 %v1702, %v1698
        %v2163 = vpack.c.b16 %v1707, %v1703
        %v2164 = vpack.c.b16 %v1708, %v1704
        %v2165 = vpack.c.b16 %v1709, %v1705
        %v2166 = vpack.c.b16 %v1710, %v1706
        %v2167 = vpack.c.b16 %v1715, %v1711
        %v2168 = vpack.c.b16 %v1716, %v1712
        %v2169 = vpack.c.b16 %v1717, %v1713
        %v2170 = vpack.c.b16 %v1718, %v1714
        %v2171 = vpack.c.b16 %v1723, %v1719
        %v2172 = vpack.c.b16 %v1724, %v1720
        %v2173 = vpack.c.b16 %v1725, %v1721
        %v2174 = vpack.c.b16 %v1726, %v1722
        %v2175 = vpack.c.b16 %v1731, %v1727
        %v2176 = vpack.c.b16 %v1732, %v1728
        %v2177 = vpack.c.b16 %v1733, %v1729
        %v2178 = vpack.c.b16 %v1734, %v1730
        %v2179 = vpack.c.b16 %v1739, %v1735
        %v2180 = vpack.c.b16 %v1740, %v1736
        %v2181 = vpack.c.b16 %v1741, %v1737
        %v2182 = vpack.c.b16 %v1742, %v1738
        %v2183 = vpack.c.b16 %v1747, %v1743
        %v2184 = vpack.c.b16 %v1748, %v1744
        %v2185 = vpack.c.b16 %v1749, %v1745
        %v2186 = vpack.c.b16 %v1750, %v1746
        %v2187 = vpack.c.b16 %v1755, %v1751
        %v2188 = vpack.c.b16 %v1756, %v1752
        %v2189 = vpack.c.b16 %v1757, %v1753
        %v2190 = vpack.c.b16 %v1758, %v1754
        %v2191 = vpack.c.b16 %v1763, %v1759
        %v2192 = vpack.c.b16 %v1764, %v1760
        %v2193 = vpack.c.b16 %v1765, %v1761
        %v2194 = vpack.c.b16 %v1766, %v1762
        %v2195 = vpack.c.b16 %v1771, %v1767
        %v2196 = vpack.c.b16 %v1772, %v1768
        %v2197 = vpack.c.b16 %v1773, %v1769
        %v2198 = vpack.c.b16 %v1774, %v1770
        %v2199 = vpack.c.b16 %v1779, %v1775
        %v2200 = vpack.c.b16 %v1780, %v1776
        %v2201 = vpack.c.b16 %v1781, %v1777
        %v2202 = vpack.c.b16 %v1782, %v1778
        %v2203 = vpack.c.b16 %v1787, %v1783
        %v2204 = vpack.c.b16 %v1788, %v1784
        %v2205 = vpack.c.b16 %v1789, %v1785
        %v2206 = vpack.c.b16 %v1790, %v1786
        %v2207 = vpack.c.b16 %v1795, %v1791
        %v2208 = vpack.c.b16 %v1796, %v1792
        %v2209 = vpack.c.b16 %v1797, %v1793
        %v2210 = vpack.c.b16 %v1798, %v1794
        %v2211 = vpack.c.b16 %v1803, %v1799
        %v2212 = vpack.c.b16 %v1804, %v1800
        %v2213 = vpack.c.b16 %v1805, %v1801
        %v2214 = vpack.c.b16 %v1806, %v1802
        %v2215 = vpack.c.b16 %v1811, %v1807
        %v2216 = vpack.c.b16 %v1812, %v1808
        %v2217 = vpack.c.b16 %v1813, %v1809
        %v2218 = vpack.c.b16 %v1814, %v1810
        %v2219 = vpack.c.b16 %v1819, %v1815
        %v2220 = vpack.c.b16 %v1820, %v1816
        %v2221 = vpack.c.b16 %v1821, %v1817
        %v2222 = vpack.c.b16 %v1822, %v1818
        %v2223 = vpack.c.b16 %v1827, %v1823
        %v2224 = vpack.c.b16 %v1828, %v1824
        %v2225 = vpack.c.b16 %v1829, %v1825
        %v2226 = vpack.c.b16 %v1830, %v1826
        %v2227 = vpack.c.b16 %v1835, %v1831
        %v2228 = vpack.c.b16 %v1836, %v1832
        %v2229 = vpack.c.b16 %v1837, %v1833
        %v2230 = vpack.c.b16 %v1838, %v1834
        %v2231 = vpack.c.b16 %v1843, %v1839
        %v2232 = vpack.c.b16 %v1844, %v1840
        %v2233 = vpack.c.b16 %v1845, %v1841
        %v2234 = vpack.c.b16 %v1846, %v1842
        %v2235 = vpack.c.b16 %v1851, %v1847
        %v2236 = vpack.c.b16 %v1852, %v1848
        %v2237 = vpack.c.b16 %v1853, %v1849
        %v2238 = vpack.c.b16 %v1854, %v1850
        %v2239 = vpack.c.b16 %v1859, %v1855
        %v2240 = vpack.c.b16 %v1860, %v1856
        %v2241 = vpack.c.b16 %v1861, %v1857
        %v2242 = vpack.c.b16 %v1862, %v1858
        %v2243 = vpack.c.b16 %v1867, %v1863
        %v2244 = vpack.c.b16 %v1868, %v1864
        %v2245 = vpack.c.b16 %v1869, %v1865
        %v2246 = vpack.c.b16 %v1870, %v1866
        %v2247 = vpack.c.b16 %v1875, %v1871
        %v2248 = vpack.c.b16 %v1876, %v1872
        %v2249 = vpack.c.b16 %v1877, %v1873
        %v2250 = vpack.c.b16 %v1878, %v1874
        %v2251 = vpack.c.b16 %v1883, %v1879
        %v2252 = vpack.c.b16 %v1884, %v1880
        %v2253 = vpack.c.b16 %v1885, %v1881
        %v2254 = vpack.c.b16 %v1886, %v1882
        %v2255 = vpack.c.b16 %v1891, %v1887
        %v2256 = vpack.c.b16 %v1892, %v1888
        %v2257 = vpack.c.b16 %v1893, %v1889
        %v2258 = vpack.c.b16 %v1894, %v1890
        %v2259 = vpack.c.b16 %v1899, %v1895
        %v2260 = vpack.c.b16 %v1900, %v1896
        %v2261 = vpack.c.b16 %v1901, %v1897
        %v2262 = vpack.c.b16 %v1902, %v1898
        %v2263 = vpack.c.b16 %v1907, %v1903
        %v2264 = vpack.c.b16 %v1908, %v1904
        %v2265 = vpack.c.b16 %v1909, %v1905
        %v2266 = vpack.c.b16 %v1910, %v1906
        %v2267 = vpack.c.b16 %v1915, %v1911
        %v2268 = vpack.c.b16 %v1916, %v1912
        %v2269 = vpack.c.b16 %v1917, %v1913
        %v2270 = vpack.c.b16 %v1918, %v1914
        %v2271 = vpack.c.b16 %v1923, %v1919
        %v2272 = vpack.c.b16 %v1924, %v1920
        %v2273 = vpack.c.b16 %v1925, %v1921
        %v2274 = vpack.c.b16 %v1926, %v1922
        %v2275 = vpack.c.b16 %v1931, %v1927
        %v2276 = vpack.c.b16 %v1932, %v1928
        %v2277 = vpack.c.b16 %v1933, %v1929
        %v2278 = vpack.c.b16 %v1934, %v1930
        %v2279 = vpack.c.b16 %v1939, %v1935
        %v2280 = vpack.c.b16 %v1940, %v1936
        %v2281 = vpack.c.b16 %v1941, %v1937
        %v2282 = vpack.c.b16 %v1942, %v1938
        %v2283 = vpack.c.b16 %v1947, %v1943
        %v2284 = vpack.c.b16 %v1948, %v1944
        %v2285 = vpack.c.b16 %v1949, %v1945
        %v2286 = vpack.c.b16 %v1950, %v1946
        %v2287 = vpack.c.b16 %v1955, %v1951
        %v2288 = vpack.c.b16 %v1956, %v1952
        %v2289 = vpack.c.b16 %v1957, %v1953
        %v2290 = vpack.c.b16 %v1958, %v1954
        %v2291 = vpack.c.b16 %v1963, %v1959
        %v2292 = vpack.c.b16 %v1964, %v1960
        %v2293 = vpack.c.b16 %v1965, %v1961
        %v2294 = vpack.c.b16 %v1966, %v1962
        %v2295 = vpack.c.b16 %v1971, %v1967
        %v2296 = vpack.c.b16 %v1972, %v1968
        %v2297 = vpack.c.b16 %v1973, %v1969
        %v2298 = vpack.c.b16 %v1974, %v1970
        %v2299 = vpack.c.b16 %v1979, %v1975
        %v2300 = vpack.c.b16 %v1980, %v1976
        %v2301 = vpack.c.b16 %v1981, %v1977
        %v2302 = vpack.c.b16 %v1982, %v1978
        %v2624 = vlaneseq
        %v2625 = vshrl.u32 %v2624, 7
        %v2626 = vsub.s32 0, %v2625
        %v2627 = vrot.slane %v1022, %v2626
        %v2628 = vlaneseq
        %v2629 = vshrl.u32 %v2628, 7
        %v2630 = vsub.s32 1, %v2629
        %v2631 = vrot.slane %v1022, %v2630
        %v2632 = vlaneseq
        %v2633 = vshrl.u32 %v2632, 7
        %v2634 = vsub.s32 2, %v2633
        %v2635 = vrot.slane %v1022, %v2634
        %v2636 = vlaneseq
        %v2637 = vshrl.u32 %v2636, 7
        %v2638 = vsub.s32 3, %v2637
        %v2639 = vrot.slane %v1022, %v2638
        %2644 = vmatprep.subr.bf16.mxu0 %v1984
        %2645 = vmatpush1.bf16.msra.mxu0 %v1983
        %2646 = vmatprep.subr.bf16.mxu0 %v1988
        %2647 = vmatpush1.bf16.msra.mxu0 %v1987
        %2648 = vmatprep.subr.bf16.mxu0 %v1992
        %2649 = vmatpush1.bf16.msra.mxu0 %v1991
        %2650 = vmatprep.subr.bf16.mxu0 %v1996
        %2651 = vmatpush1.bf16.msra.mxu0 %v1995
        %2652 = vmatprep.subr.bf16.mxu0 %v2000
        %2653 = vmatpush1.bf16.msra.mxu0 %v1999
        %2654 = vmatprep.subr.bf16.mxu0 %v2004
        %2655 = vmatpush1.bf16.msra.mxu0 %v2003
        %2656 = vmatprep.subr.bf16.mxu0 %v2008
        %2657 = vmatpush1.bf16.msra.mxu0 %v2007
        %2658 = vmatprep.subr.bf16.mxu0 %v2012
        %2659 = vmatpush1.bf16.msra.mxu0 %v2011
        %2660 = vmatprep.subr.bf16.mxu0 %v2016
        %2661 = vmatpush1.bf16.msra.mxu0 %v2015
        %2662 = vmatprep.subr.bf16.mxu0 %v2020
        %2663 = vmatpush1.bf16.msra.mxu0 %v2019
        %2664 = vmatprep.subr.bf16.mxu0 %v2024
        %2665 = vmatpush1.bf16.msra.mxu0 %v2023
        %2666 = vmatprep.subr.bf16.mxu0 %v2028
        %2667 = vmatpush1.bf16.msra.mxu0 %v2027
        %2668 = vmatprep.subr.bf16.mxu0 %v2032
        %2669 = vmatpush1.bf16.msra.mxu0 %v2031
        %2670 = vmatprep.subr.bf16.mxu0 %v2036
        %2671 = vmatpush1.bf16.msra.mxu0 %v2035
        %2672 = vmatprep.subr.bf16.mxu0 %v2040
        %2673 = vmatpush1.bf16.msra.mxu0 %v2039
        %2674 = vmatprep.subr.bf16.mxu0 %v2044
        %2675 = vmatpush1.bf16.msra.mxu0 %v2043
        %2676 = vmatprep.mubr.bf16.mxu0 %v693
        %2677 = vmatmul.mubr.bf16.gmra.mrb[0].mxu0 %v692
        %v2678 = vpop.f32.mrb[0].mxu0
        %v2679 = vadd.f32 %v2627, %v2678
        %v2680 = vpop.f32.mrb[0].mxu0
        %v2681 = vadd.f32 %v2631, %v2680
        %v2682 = vpop.f32.mrb[0].mxu0
        %v2683 = vpop.f32.mrb[0].mxu0
        %2684 = vdwg.mxu0
        %2685 = vmatprep.subr.bf16.mxu0 %v2048
        %2686 = vmatpush1.bf16.msra.mxu0 %v2047
        %2687 = vmatprep.subr.bf16.mxu0 %v2052
        %2688 = vmatpush1.bf16.msra.mxu0 %v2051
        %2689 = vmatprep.subr.bf16.mxu0 %v2056
        %2690 = vmatpush1.bf16.msra.mxu0 %v2055
        %2691 = vmatprep.subr.bf16.mxu0 %v2060
        %2692 = vmatpush1.bf16.msra.mxu0 %v2059
        %2693 = vmatprep.subr.bf16.mxu0 %v2064
        %2694 = vmatpush1.bf16.msra.mxu0 %v2063
        %2695 = vmatprep.subr.bf16.mxu0 %v2068
        %2696 = vmatpush1.bf16.msra.mxu0 %v2067
        %2697 = vmatprep.subr.bf16.mxu0 %v2072
        %2698 = vmatpush1.bf16.msra.mxu0 %v2071
        %2699 = vmatprep.subr.bf16.mxu0 %v2076
        %2700 = vmatpush1.bf16.msra.mxu0 %v2075
        %2701 = vmatprep.subr.bf16.mxu0 %v2080
        %2702 = vmatpush1.bf16.msra.mxu0 %v2079
        %2703 = vmatprep.subr.bf16.mxu0 %v2084
        %2704 = vmatpush1.bf16.msra.mxu0 %v2083
        %2705 = vmatprep.subr.bf16.mxu0 %v2088
        %2706 = vmatpush1.bf16.msra.mxu0 %v2087
        %2707 = vmatprep.subr.bf16.mxu0 %v2092
        %2708 = vmatpush1.bf16.msra.mxu0 %v2091
        %2709 = vmatprep.subr.bf16.mxu0 %v2096
        %2710 = vmatpush1.bf16.msra.mxu0 %v2095
        %2711 = vmatprep.subr.bf16.mxu0 %v2100
        %2712 = vmatpush1.bf16.msra.mxu0 %v2099
        %2713 = vmatprep.subr.bf16.mxu0 %v2104
        %2714 = vmatpush1.bf16.msra.mxu0 %v2103
        %2715 = vmatprep.subr.bf16.mxu0 %v2108
        %2716 = vmatpush1.bf16.msra.mxu0 %v2107
        %2717 = vmatprep.mubr.bf16.mxu0 %v695
        %2718 = vmatmul.mubr.bf16.gmra.mrb[0].mxu0 %v694
        %v2719 = vpop.f32.mrb[0].mxu0
        %v2720 = vadd.f32 %v2679, %v2719
        %v2721 = vpop.f32.mrb[0].mxu0
        %v2722 = vadd.f32 %v2681, %v2721
        %v2723 = vpop.f32.mrb[0].mxu0
        %v2724 = vpop.f32.mrb[0].mxu0
        %2725 = vdwg.mxu0
        %2726 = vmatprep.subr.bf16.mxu0 %v2112
        %2727 = vmatpush1.bf16.msra.mxu0 %v2111
        %2728 = vmatprep.subr.bf16.mxu0 %v2116
        %2729 = vmatpush1.bf16.msra.mxu0 %v2115
        %2730 = vmatprep.subr.bf16.mxu0 %v2120
        %2731 = vmatpush1.bf16.msra.mxu0 %v2119
        %2732 = vmatprep.subr.bf16.mxu0 %v2124
        %2733 = vmatpush1.bf16.msra.mxu0 %v2123
        %2734 = vmatprep.subr.bf16.mxu0 %v2128
        %2735 = vmatpush1.bf16.msra.mxu0 %v2127
        %2736 = vmatprep.subr.bf16.mxu0 %v2132
        %2737 = vmatpush1.bf16.msra.mxu0 %v2131
        %2738 = vmatprep.subr.bf16.mxu0 %v2136
        %2739 = vmatpush1.bf16.msra.mxu0 %v2135
        %2740 = vmatprep.subr.bf16.mxu0 %v2140
        %2741 = vmatpush1.bf16.msra.mxu0 %v2139
        %2742 = vmatprep.subr.bf16.mxu0 %v2144
        %2743 = vmatpush1.bf16.msra.mxu0 %v2143
        %2744 = vmatprep.subr.bf16.mxu0 %v2148
        %2745 = vmatpush1.bf16.msra.mxu0 %v2147
        %2746 = vmatprep.subr.bf16.mxu0 %v2152
        %2747 = vmatpush1.bf16.msra.mxu0 %v2151
        %2748 = vmatprep.subr.bf16.mxu0 %v2156
        %2749 = vmatpush1.bf16.msra.mxu0 %v2155
        %2750 = vmatprep.subr.bf16.mxu0 %v2160
        %2751 = vmatpush1.bf16.msra.mxu0 %v2159
        %2752 = vmatprep.subr.bf16.mxu0 %v2164
        %2753 = vmatpush1.bf16.msra.mxu0 %v2163
        %2754 = vmatprep.subr.bf16.mxu0 %v2168
        %2755 = vmatpush1.bf16.msra.mxu0 %v2167
        %2756 = vmatprep.subr.bf16.mxu0 %v2172
        %2757 = vmatpush1.bf16.msra.mxu0 %v2171
        %2758 = vmatprep.mubr.bf16.mxu0 %v697
        %2759 = vmatmul.mubr.bf16.gmra.mrb[0].mxu0 %v696
        %v2760 = vpop.f32.mrb[0].mxu0
        %v2761 = vadd.f32 %v2720, %v2760
        %v2762 = vpop.f32.mrb[0].mxu0
        %v2763 = vadd.f32 %v2722, %v2762
        %v2764 = vpop.f32.mrb[0].mxu0
        %v2765 = vpop.f32.mrb[0].mxu0
        %2766 = vdwg.mxu0
        %2767 = vmatprep.subr.bf16.mxu0 %v2176
        %2768 = vmatpush1.bf16.msra.mxu0 %v2175
        %2769 = vmatprep.subr.bf16.mxu0 %v2180
        %2770 = vmatpush1.bf16.msra.mxu0 %v2179
        %2771 = vmatprep.subr.bf16.mxu0 %v2184
        %2772 = vmatpush1.bf16.msra.mxu0 %v2183
        %2773 = vmatprep.subr.bf16.mxu0 %v2188
        %2774 = vmatpush1.bf16.msra.mxu0 %v2187
        %2775 = vmatprep.subr.bf16.mxu0 %v2192
        %2776 = vmatpush1.bf16.msra.mxu0 %v2191
        %2777 = vmatprep.subr.bf16.mxu0 %v2196
        %2778 = vmatpush1.bf16.msra.mxu0 %v2195
        %2779 = vmatprep.subr.bf16.mxu0 %v2200
        %2780 = vmatpush1.bf16.msra.mxu0 %v2199
        %2781 = vmatprep.subr.bf16.mxu0 %v2204
        %2782 = vmatpush1.bf16.msra.mxu0 %v2203
        %2783 = vmatprep.subr.bf16.mxu0 %v2208
        %2784 = vmatpush1.bf16.msra.mxu0 %v2207
        %2785 = vmatprep.subr.bf16.mxu0 %v2212
        %2786 = vmatpush1.bf16.msra.mxu0 %v2211
        %2787 = vmatprep.subr.bf16.mxu0 %v2216
        %2788 = vmatpush1.bf16.msra.mxu0 %v2215
        %2789 = vmatprep.subr.bf16.mxu0 %v2220
        %2790 = vmatpush1.bf16.msra.mxu0 %v2219
        %2791 = vmatprep.subr.bf16.mxu0 %v2224
        %2792 = vmatpush1.bf16.msra.mxu0 %v2223
        %2793 = vmatprep.subr.bf16.mxu0 %v2228
        %2794 = vmatpush1.bf16.msra.mxu0 %v2227
        %2795 = vmatprep.subr.bf16.mxu0 %v2232
        %2796 = vmatpush1.bf16.msra.mxu0 %v2231
        %2797 = vmatprep.subr.bf16.mxu0 %v2236
        %2798 = vmatpush1.bf16.msra.mxu0 %v2235
        %2799 = vmatprep.mubr.bf16.mxu0 %v699
        %2800 = vmatmul.mubr.bf16.gmra.mrb[0].mxu0 %v698
        %v2801 = vpop.f32.mrb[0].mxu0
        %v2802 = vadd.f32 %v2761, %v2801
        %v2803 = vpop.f32.mrb[0].mxu0
        %v2804 = vadd.f32 %v2763, %v2803
        %v2805 = vpop.f32.mrb[0].mxu0
        %v2806 = vpop.f32.mrb[0].mxu0
        %2807 = vdwg.mxu0
        %2808 = vmatprep.subr.bf16.mxu0 %v2240
        %2809 = vmatpush1.bf16.msra.mxu0 %v2239
        %2810 = vmatprep.subr.bf16.mxu0 %v2244
        %2811 = vmatpush1.bf16.msra.mxu0 %v2243
        %2812 = vmatprep.subr.bf16.mxu0 %v2248
        %2813 = vmatpush1.bf16.msra.mxu0 %v2247
        %2814 = vmatprep.subr.bf16.mxu0 %v2252
        %2815 = vmatpush1.bf16.msra.mxu0 %v2251
        %2816 = vmatprep.subr.bf16.mxu0 %v2256
        %2817 = vmatpush1.bf16.msra.mxu0 %v2255
        %2818 = vmatprep.subr.bf16.mxu0 %v2260
        %2819 = vmatpush1.bf16.msra.mxu0 %v2259
        %2820 = vmatprep.subr.bf16.mxu0 %v2264
        %2821 = vmatpush1.bf16.msra.mxu0 %v2263
        %2822 = vmatprep.subr.bf16.mxu0 %v2268
        %2823 = vmatpush1.bf16.msra.mxu0 %v2267
        %2824 = vmatprep.subr.bf16.mxu0 %v2272
        %2825 = vmatpush1.bf16.msra.mxu0 %v2271
        %2826 = vmatprep.subr.bf16.mxu0 %v2276
        %2827 = vmatpush1.bf16.msra.mxu0 %v2275
        %2828 = vmatprep.subr.bf16.mxu0 %v2280
        %2829 = vmatpush1.bf16.msra.mxu0 %v2279
        %2830 = vmatprep.subr.bf16.mxu0 %v2284
        %2831 = vmatpush1.bf16.msra.mxu0 %v2283
        %2832 = vmatprep.subr.bf16.mxu0 %v2288
        %2833 = vmatpush1.bf16.msra.mxu0 %v2287
        %2834 = vmatprep.subr.bf16.mxu0 %v2292
        %2835 = vmatpush1.bf16.msra.mxu0 %v2291
        %2836 = vmatprep.subr.bf16.mxu0 %v2296
        %2837 = vmatpush1.bf16.msra.mxu0 %v2295
        %2838 = vmatprep.subr.bf16.mxu0 %v2300
        %2839 = vmatpush1.bf16.msra.mxu0 %v2299
        %2840 = vmatprep.mubr.bf16.mxu0 %v701
        %2841 = vmatmul.mubr.bf16.gmra.mrb[0].mxu0 %v700
        %v2842 = vpop.f32.mrb[0].mxu0
        %v2843 = vadd.f32 %v2802, %v2842
        %v2844 = vpop.f32.mrb[0].mxu0
        %v2845 = vadd.f32 %v2804, %v2844
        %v2846 = vpop.f32.mrb[0].mxu0
        %v2847 = vpop.f32.mrb[0].mxu0
        %2848 = vdwg.mxu0
        %2849 = vmatprep.subr.bf16.mxu0 %v1986
        %2850 = vmatpush1.bf16.msra.mxu0 %v1985
        %2851 = vmatprep.subr.bf16.mxu0 %v1990
        %2852 = vmatpush1.bf16.msra.mxu0 %v1989
        %2853 = vmatprep.subr.bf16.mxu0 %v1994
        %2854 = vmatpush1.bf16.msra.mxu0 %v1993
        %2855 = vmatprep.subr.bf16.mxu0 %v1998
        %2856 = vmatpush1.bf16.msra.mxu0 %v1997
        %2857 = vmatprep.subr.bf16.mxu0 %v2002
        %2858 = vmatpush1.bf16.msra.mxu0 %v2001
        %2859 = vmatprep.subr.bf16.mxu0 %v2006
        %2860 = vmatpush1.bf16.msra.mxu0 %v2005
        %2861 = vmatprep.subr.bf16.mxu0 %v2010
        %2862 = vmatpush1.bf16.msra.mxu0 %v2009
        %2863 = vmatprep.subr.bf16.mxu0 %v2014
        %2864 = vmatpush1.bf16.msra.mxu0 %v2013
        %2865 = vmatprep.subr.bf16.mxu0 %v2018
        %2866 = vmatpush1.bf16.msra.mxu0 %v2017
        %2867 = vmatprep.subr.bf16.mxu0 %v2022
        %2868 = vmatpush1.bf16.msra.mxu0 %v2021
        %2869 = vmatprep.subr.bf16.mxu0 %v2026
        %2870 = vmatpush1.bf16.msra.mxu0 %v2025
        %2871 = vmatprep.subr.bf16.mxu0 %v2030
        %2872 = vmatpush1.bf16.msra.mxu0 %v2029
        %2873 = vmatprep.subr.bf16.mxu0 %v2034
        %2874 = vmatpush1.bf16.msra.mxu0 %v2033
        %2875 = vmatprep.subr.bf16.mxu0 %v2038
        %2876 = vmatpush1.bf16.msra.mxu0 %v2037
        %2877 = vmatprep.subr.bf16.mxu0 %v2042
        %2878 = vmatpush1.bf16.msra.mxu0 %v2041
        %2879 = vmatprep.subr.bf16.mxu0 %v2046
        %2880 = vmatpush1.bf16.msra.mxu0 %v2045
        %2881 = vmatprep.mubr.bf16.mxu0 %v693
        %2882 = vmatmul.mubr.bf16.gmra.mrb[0].mxu0 %v692
        %v2883 = vpop.f32.mrb[0].mxu0
        %v2884 = vadd.f32 %v2635, %v2883
        %v2885 = vpop.f32.mrb[0].mxu0
        %v2886 = vadd.f32 %v2639, %v2885
        %v2887 = vpop.f32.mrb[0].mxu0
        %v2888 = vpop.f32.mrb[0].mxu0
        %2889 = vdwg.mxu0
        %2890 = vmatprep.subr.bf16.mxu0 %v2050
        %2891 = vmatpush1.bf16.msra.mxu0 %v2049
        %2892 = vmatprep.subr.bf16.mxu0 %v2054
        %2893 = vmatpush1.bf16.msra.mxu0 %v2053
        %2894 = vmatprep.subr.bf16.mxu0 %v2058
        %2895 = vmatpush1.bf16.msra.mxu0 %v2057
        %2896 = vmatprep.subr.bf16.mxu0 %v2062
        %2897 = vmatpush1.bf16.msra.mxu0 %v2061
        %2898 = vmatprep.subr.bf16.mxu0 %v2066
        %2899 = vmatpush1.bf16.msra.mxu0 %v2065
        %2900 = vmatprep.subr.bf16.mxu0 %v2070
        %2901 = vmatpush1.bf16.msra.mxu0 %v2069
        %2902 = vmatprep.subr.bf16.mxu0 %v2074
        %2903 = vmatpush1.bf16.msra.mxu0 %v2073
        %2904 = vmatprep.subr.bf16.mxu0 %v2078
        %2905 = vmatpush1.bf16.msra.mxu0 %v2077
        %2906 = vmatprep.subr.bf16.mxu0 %v2082
        %2907 = vmatpush1.bf16.msra.mxu0 %v2081
        %2908 = vmatprep.subr.bf16.mxu0 %v2086
        %2909 = vmatpush1.bf16.msra.mxu0 %v2085
        %2910 = vmatprep.subr.bf16.mxu0 %v2090
        %2911 = vmatpush1.bf16.msra.mxu0 %v2089
        %2912 = vmatprep.subr.bf16.mxu0 %v2094
        %2913 = vmatpush1.bf16.msra.mxu0 %v2093
        %2914 = vmatprep.subr.bf16.mxu0 %v2098
        %2915 = vmatpush1.bf16.msra.mxu0 %v2097
        %2916 = vmatprep.subr.bf16.mxu0 %v2102
        %2917 = vmatpush1.bf16.msra.mxu0 %v2101
        %2918 = vmatprep.subr.bf16.mxu0 %v2106
        %2919 = vmatpush1.bf16.msra.mxu0 %v2105
        %2920 = vmatprep.subr.bf16.mxu0 %v2110
        %2921 = vmatpush1.bf16.msra.mxu0 %v2109
        %2922 = vmatprep.mubr.bf16.mxu0 %v695
        %2923 = vmatmul.mubr.bf16.gmra.mrb[0].mxu0 %v694
        %v2924 = vpop.f32.mrb[0].mxu0
        %v2925 = vadd.f32 %v2884, %v2924
        %v2926 = vpop.f32.mrb[0].mxu0
        %v2927 = vadd.f32 %v2886, %v2926
        %v2928 = vpop.f32.mrb[0].mxu0
        %v2929 = vpop.f32.mrb[0].mxu0
        %2930 = vdwg.mxu0
        %2931 = vmatprep.subr.bf16.mxu0 %v2114
        %2932 = vmatpush1.bf16.msra.mxu0 %v2113
        %2933 = vmatprep.subr.bf16.mxu0 %v2118
        %2934 = vmatpush1.bf16.msra.mxu0 %v2117
        %2935 = vmatprep.subr.bf16.mxu0 %v2122
        %2936 = vmatpush1.bf16.msra.mxu0 %v2121
        %2937 = vmatprep.subr.bf16.mxu0 %v2126
        %2938 = vmatpush1.bf16.msra.mxu0 %v2125
        %2939 = vmatprep.subr.bf16.mxu0 %v2130
        %2940 = vmatpush1.bf16.msra.mxu0 %v2129
        %2941 = vmatprep.subr.bf16.mxu0 %v2134
        %2942 = vmatpush1.bf16.msra.mxu0 %v2133
        %2943 = vmatprep.subr.bf16.mxu0 %v2138
        %2944 = vmatpush1.bf16.msra.mxu0 %v2137
        %2945 = vmatprep.subr.bf16.mxu0 %v2142
        %2946 = vmatpush1.bf16.msra.mxu0 %v2141
        %2947 = vmatprep.subr.bf16.mxu0 %v2146
        %2948 = vmatpush1.bf16.msra.mxu0 %v2145
        %2949 = vmatprep.subr.bf16.mxu0 %v2150
        %2950 = vmatpush1.bf16.msra.mxu0 %v2149
        %2951 = vmatprep.subr.bf16.mxu0 %v2154
        %2952 = vmatpush1.bf16.msra.mxu0 %v2153
        %2953 = vmatprep.subr.bf16.mxu0 %v2158
        %2954 = vmatpush1.bf16.msra.mxu0 %v2157
        %2955 = vmatprep.subr.bf16.mxu0 %v2162
        %2956 = vmatpush1.bf16.msra.mxu0 %v2161
        %2957 = vmatprep.subr.bf16.mxu0 %v2166
        %2958 = vmatpush1.bf16.msra.mxu0 %v2165
        %2959 = vmatprep.subr.bf16.mxu0 %v2170
        %2960 = vmatpush1.bf16.msra.mxu0 %v2169
        %2961 = vmatprep.subr.bf16.mxu0 %v2174
        %2962 = vmatpush1.bf16.msra.mxu0 %v2173
        %2963 = vmatprep.mubr.bf16.mxu0 %v697
        %2964 = vmatmul.mubr.bf16.gmra.mrb[0].mxu0 %v696
        %v2965 = vpop.f32.mrb[0].mxu0
        %v2966 = vadd.f32 %v2925, %v2965
        %v2967 = vpop.f32.mrb[0].mxu0
        %v2968 = vadd.f32 %v2927, %v2967
        %v2969 = vpop.f32.mrb[0].mxu0
        %v2970 = vpop.f32.mrb[0].mxu0
        %2971 = vdwg.mxu0
        %2972 = vmatprep.subr.bf16.mxu0 %v2178
        %2973 = vmatpush1.bf16.msra.mxu0 %v2177
        %2974 = vmatprep.subr.bf16.mxu0 %v2182
        %2975 = vmatpush1.bf16.msra.mxu0 %v2181
        %2976 = vmatprep.subr.bf16.mxu0 %v2186
        %2977 = vmatpush1.bf16.msra.mxu0 %v2185
        %2978 = vmatprep.subr.bf16.mxu0 %v2190
        %2979 = vmatpush1.bf16.msra.mxu0 %v2189
        %2980 = vmatprep.subr.bf16.mxu0 %v2194
        %2981 = vmatpush1.bf16.msra.mxu0 %v2193
        %2982 = vmatprep.subr.bf16.mxu0 %v2198
        %2983 = vmatpush1.bf16.msra.mxu0 %v2197
        %2984 = vmatprep.subr.bf16.mxu0 %v2202
        %2985 = vmatpush1.bf16.msra.mxu0 %v2201
        %2986 = vmatprep.subr.bf16.mxu0 %v2206
        %2987 = vmatpush1.bf16.msra.mxu0 %v2205
        %2988 = vmatprep.subr.bf16.mxu0 %v2210
        %2989 = vmatpush1.bf16.msra.mxu0 %v2209
        %2990 = vmatprep.subr.bf16.mxu0 %v2214
        %2991 = vmatpush1.bf16.msra.mxu0 %v2213
        %2992 = vmatprep.subr.bf16.mxu0 %v2218
        %2993 = vmatpush1.bf16.msra.mxu0 %v2217
        %2994 = vmatprep.subr.bf16.mxu0 %v2222
        %2995 = vmatpush1.bf16.msra.mxu0 %v2221
        %2996 = vmatprep.subr.bf16.mxu0 %v2226
        %2997 = vmatpush1.bf16.msra.mxu0 %v2225
        %2998 = vmatprep.subr.bf16.mxu0 %v2230
        %2999 = vmatpush1.bf16.msra.mxu0 %v2229
        %3000 = vmatprep.subr.bf16.mxu0 %v2234
        %3001 = vmatpush1.bf16.msra.mxu0 %v2233
        %3002 = vmatprep.subr.bf16.mxu0 %v2238
        %3003 = vmatpush1.bf16.msra.mxu0 %v2237
        %3004 = vmatprep.mubr.bf16.mxu0 %v699
        %3005 = vmatmul.mubr.bf16.gmra.mrb[0].mxu0 %v698
        %v3006 = vpop.f32.mrb[0].mxu0
        %v3007 = vadd.f32 %v2966, %v3006
        %v3008 = vpop.f32.mrb[0].mxu0
        %v3009 = vadd.f32 %v2968, %v3008
        %v3010 = vpop.f32.mrb[0].mxu0
        %v3011 = vpop.f32.mrb[0].mxu0
        %3012 = vdwg.mxu0
        %3013 = vmatprep.subr.bf16.mxu0 %v2242
        %3014 = vmatpush1.bf16.msra.mxu0 %v2241
        %3015 = vmatprep.subr.bf16.mxu0 %v2246
        %3016 = vmatpush1.bf16.msra.mxu0 %v2245
        %3017 = vmatprep.subr.bf16.mxu0 %v2250
        %3018 = vmatpush1.bf16.msra.mxu0 %v2249
        %3019 = vmatprep.subr.bf16.mxu0 %v2254
        %3020 = vmatpush1.bf16.msra.mxu0 %v2253
        %3021 = vmatprep.subr.bf16.mxu0 %v2258
        %3022 = vmatpush1.bf16.msra.mxu0 %v2257
        %3023 = vmatprep.subr.bf16.mxu0 %v2262
        %3024 = vmatpush1.bf16.msra.mxu0 %v2261
        %3025 = vmatprep.subr.bf16.mxu0 %v2266
        %3026 = vmatpush1.bf16.msra.mxu0 %v2265
        %3027 = vmatprep.subr.bf16.mxu0 %v2270
        %3028 = vmatpush1.bf16.msra.mxu0 %v2269
        %3029 = vmatprep.subr.bf16.mxu0 %v2274
        %3030 = vmatpush1.bf16.msra.mxu0 %v2273
        %3031 = vmatprep.subr.bf16.mxu0 %v2278
        %3032 = vmatpush1.bf16.msra.mxu0 %v2277
        %3033 = vmatprep.subr.bf16.mxu0 %v2282
        %3034 = vmatpush1.bf16.msra.mxu0 %v2281
        %3035 = vmatprep.subr.bf16.mxu0 %v2286
        %3036 = vmatpush1.bf16.msra.mxu0 %v2285
        %3037 = vmatprep.subr.bf16.mxu0 %v2290
        %3038 = vmatpush1.bf16.msra.mxu0 %v2289
        %3039 = vmatprep.subr.bf16.mxu0 %v2294
        %3040 = vmatpush1.bf16.msra.mxu0 %v2293
        %3041 = vmatprep.subr.bf16.mxu0 %v2298
        %3042 = vmatpush1.bf16.msra.mxu0 %v2297
        %3043 = vmatprep.subr.bf16.mxu0 %v2302
        %3044 = vmatpush1.bf16.msra.mxu0 %v2301
        %3045 = vmatprep.mubr.bf16.mxu0 %v701
        %3046 = vmatmul.mubr.bf16.gmra.mrb[0].mxu0 %v700
        %v3047 = vpop.f32.mrb[0].mxu0
        %v3048 = vadd.f32 %v3007, %v3047
        %v3049 = vpop.f32.mrb[0].mxu0
        %v3050 = vadd.f32 %v3009, %v3049
        %v3051 = vpop.f32.mrb[0].mxu0
        %v3052 = vpop.f32.mrb[0].mxu0
        %3053 = vdwg.mxu0
        %v3054 = vmax.f32 %v2843, 0.0
        %v3055 = vmax.f32 %v2845, 0.0
        %v3056 = vmax.f32 %v3048, 0.0
        %v3057 = vmax.f32 %v3050, 0.0
        %v3058 = vpack.c.bf16 %v3054, %v3054
        %v3059 = vpack.c.bf16 %v3055, %v3055
        %v3060 = vpack.c.bf16 %v3056, %v3056
        %v3061 = vpack.c.bf16 %v3057, %v3057
        %v3062 = vld [vmem:[%s3] sm:$0xf]
        %v3063 = vld [vmem:[%s3 + $0x4] sm:$0xf]
        %v3064 = vld [vmem:[%s3 + $0x8] sm:$0xf]
        %v3065 = vld [vmem:[%s3 + $0xc] sm:$0xf]
        %v3066 = vld [vmem:[%s3 + $0x10] sm:$0xf]
        %v3067 = vld [vmem:[%s3 + $0x14] sm:$0xf]
        %v3068 = vld [vmem:[%s3 + $0x18] sm:$0xf]
        %v3069 = vld [vmem:[%s3 + $0x1c] sm:$0xf]
        %v3070 = vld [vmem:[%s3 + $0x20] sm:$0xf]
        %v3071 = vld [vmem:[%s3 + $0x24] sm:$0xf]
        %v3072 = vld [vmem:[%s3 + $0x28] sm:$0xf]
        %v3073 = vld [vmem:[%s3 + $0x2c] sm:$0xf]
        %v3074 = vld [vmem:[%s3 + $0x30] sm:$0xf]
        %v3075 = vld [vmem:[%s3 + $0x34] sm:$0xf]
        %v3076 = vld [vmem:[%s3 + $0x38] sm:$0xf]
        %v3077 = vld [vmem:[%s3 + $0x3c] sm:$0xf]
        %v3078 = vld [vmem:[%s3 + $0x40] sm:$0xf]
        %v3079 = vld [vmem:[%s3 + $0x44] sm:$0xf]
        %v3080 = vld [vmem:[%s3 + $0x48] sm:$0xf]
        %v3081 = vld [vmem:[%s3 + $0x4c] sm:$0xf]
        %v3082 = vld [vmem:[%s3 + $0x50] sm:$0xf]
        %v3083 = vld [vmem:[%s3 + $0x54] sm:$0xf]
        %v3084 = vld [vmem:[%s3 + $0x58] sm:$0xf]
        %v3085 = vld [vmem:[%s3 + $0x5c] sm:$0xf]
        %v3086 = vld [vmem:[%s3 + $0x60] sm:$0xf]
        %v3087 = vld [vmem:[%s3 + $0x64] sm:$0xf]
        %v3088 = vld [vmem:[%s3 + $0x68] sm:$0xf]
        %v3089 = vld [vmem:[%s3 + $0x6c] sm:$0xf]
        %v3090 = vld [vmem:[%s3 + $0x70] sm:$0xf]
        %v3091 = vld [vmem:[%s3 + $0x74] sm:$0xf]
        %v3092 = vld [vmem:[%s3 + $0x78] sm:$0xf]
        %v3093 = vld [vmem:[%s3 + $0x7c] sm:$0xf]
        %v3094 = vld [vmem:[%s3 + $0x80] sm:$0xf]
        %v3095 = vld [vmem:[%s3 + $0x84] sm:$0xf]
        %v3096 = vld [vmem:[%s3 + $0x88] sm:$0xf]
        %v3097 = vld [vmem:[%s3 + $0x8c] sm:$0xf]
        %v3098 = vld [vmem:[%s3 + $0x90] sm:$0xf]
        %v3099 = vld [vmem:[%s3 + $0x94] sm:$0xf]
        %v3100 = vld [vmem:[%s3 + $0x98] sm:$0xf]
        %v3101 = vld [vmem:[%s3 + $0x9c] sm:$0xf]
        %v3102 = vld [vmem:[%s3 + $0xa0] sm:$0xf]
        %v3103 = vld [vmem:[%s3 + $0xa4] sm:$0xf]
        %v3104 = vld [vmem:[%s3 + $0xa8] sm:$0xf]
        %v3105 = vld [vmem:[%s3 + $0xac] sm:$0xf]
        %v3106 = vld [vmem:[%s3 + $0xb0] sm:$0xf]
        %v3107 = vld [vmem:[%s3 + $0xb4] sm:$0xf]
        %v3108 = vld [vmem:[%s3 + $0xb8] sm:$0xf]
        %v3109 = vld [vmem:[%s3 + $0xbc] sm:$0xf]
        %v3110 = vld [vmem:[%s3 + $0xc0] sm:$0xf]
        %v3111 = vld [vmem:[%s3 + $0xc4] sm:$0xf]
        %v3112 = vld [vmem:[%s3 + $0xc8] sm:$0xf]
        %v3113 = vld [vmem:[%s3 + $0xcc] sm:$0xf]
        %v3114 = vld [vmem:[%s3 + $0xd0] sm:$0xf]
        %v3115 = vld [vmem:[%s3 + $0xd4] sm:$0xf]
        %v3116 = vld [vmem:[%s3 + $0xd8] sm:$0xf]
        %v3117 = vld [vmem:[%s3 + $0xdc] sm:$0xf]
        %v3118 = vld [vmem:[%s3 + $0xe0] sm:$0xf]
        %v3119 = vld [vmem:[%s3 + $0xe4] sm:$0xf]
        %v3120 = vld [vmem:[%s3 + $0xe8] sm:$0xf]
        %v3121 = vld [vmem:[%s3 + $0xec] sm:$0xf]
        %v3122 = vld [vmem:[%s3 + $0xf0] sm:$0xf]
        %v3123 = vld [vmem:[%s3 + $0xf4] sm:$0xf]
        %v3124 = vld [vmem:[%s3 + $0xf8] sm:$0xf]
        %v3125 = vld [vmem:[%s3 + $0xfc] sm:$0xf]
        %v3126 = vld [vmem:[%s4] sm:$0x1]
        %v3191 = vunpack.c.l.b16 %v3062
        %v3192 = vunpack.c.l.b16 %v3063
        %v3193 = vunpack.c.l.b16 %v3064
        %v3194 = vunpack.c.l.b16 %v3065
        %v3195 = vunpack.c.l.b16 %v3066
        %v3196 = vunpack.c.l.b16 %v3067
        %v3197 = vunpack.c.l.b16 %v3068
        %v3198 = vunpack.c.l.b16 %v3069
        %v3199 = vunpack.c.l.b16 %v3070
        %v3200 = vunpack.c.l.b16 %v3071
        %v3201 = vunpack.c.l.b16 %v3072
        %v3202 = vunpack.c.l.b16 %v3073
        %v3203 = vunpack.c.l.b16 %v3074
        %v3204 = vunpack.c.l.b16 %v3075
        %v3205 = vunpack.c.l.b16 %v3076
        %v3206 = vunpack.c.l.b16 %v3077
        %v3207 = vunpack.c.l.b16 %v3078
        %v3208 = vunpack.c.l.b16 %v3079
        %v3209 = vunpack.c.l.b16 %v3080
        %v3210 = vunpack.c.l.b16 %v3081
        %v3211 = vunpack.c.l.b16 %v3082
        %v3212 = vunpack.c.l.b16 %v3083
        %v3213 = vunpack.c.l.b16 %v3084
        %v3214 = vunpack.c.l.b16 %v3085
        %v3215 = vunpack.c.l.b16 %v3086
        %v3216 = vunpack.c.l.b16 %v3087
        %v3217 = vunpack.c.l.b16 %v3088
        %v3218 = vunpack.c.l.b16 %v3089
        %v3219 = vunpack.c.l.b16 %v3090
        %v3220 = vunpack.c.l.b16 %v3091
        %v3221 = vunpack.c.l.b16 %v3092
        %v3222 = vunpack.c.l.b16 %v3093
        %v3223 = vunpack.c.l.b16 %v3094
        %v3224 = vunpack.c.l.b16 %v3095
        %v3225 = vunpack.c.l.b16 %v3096
        %v3226 = vunpack.c.l.b16 %v3097
        %v3227 = vunpack.c.l.b16 %v3098
        %v3228 = vunpack.c.l.b16 %v3099
        %v3229 = vunpack.c.l.b16 %v3100
        %v3230 = vunpack.c.l.b16 %v3101
        %v3231 = vunpack.c.l.b16 %v3102
        %v3232 = vunpack.c.l.b16 %v3103
        %v3233 = vunpack.c.l.b16 %v3104
        %v3234 = vunpack.c.l.b16 %v3105
        %v3235 = vunpack.c.l.b16 %v3106
        %v3236 = vunpack.c.l.b16 %v3107
        %v3237 = vunpack.c.l.b16 %v3108
        %v3238 = vunpack.c.l.b16 %v3109
        %v3239 = vunpack.c.l.b16 %v3110
        %v3240 = vunpack.c.l.b16 %v3111
        %v3241 = vunpack.c.l.b16 %v3112
        %v3242 = vunpack.c.l.b16 %v3113
        %v3243 = vunpack.c.l.b16 %v3114
        %v3244 = vunpack.c.l.b16 %v3115
        %v3245 = vunpack.c.l.b16 %v3116
        %v3246 = vunpack.c.l.b16 %v3117
        %v3247 = vunpack.c.l.b16 %v3118
        %v3248 = vunpack.c.l.b16 %v3119
        %v3249 = vunpack.c.l.b16 %v3120
        %v3250 = vunpack.c.l.b16 %v3121
        %v3251 = vunpack.c.l.b16 %v3122
        %v3252 = vunpack.c.l.b16 %v3123
        %v3253 = vunpack.c.l.b16 %v3124
        %v3254 = vunpack.c.l.b16 %v3125
        %v3255 = vpack.c.b16 %v3192, %v3191
        %v3256 = vpack.c.b16 %v3194, %v3193
        %v3257 = vpack.c.b16 %v3196, %v3195
        %v3258 = vpack.c.b16 %v3198, %v3197
        %v3259 = vpack.c.b16 %v3200, %v3199
        %v3260 = vpack.c.b16 %v3202, %v3201
        %v3261 = vpack.c.b16 %v3204, %v3203
        %v3262 = vpack.c.b16 %v3206, %v3205
        %v3263 = vpack.c.b16 %v3208, %v3207
        %v3264 = vpack.c.b16 %v3210, %v3209
        %v3265 = vpack.c.b16 %v3212, %v3211
        %v3266 = vpack.c.b16 %v3214, %v3213
        %v3267 = vpack.c.b16 %v3216, %v3215
        %v3268 = vpack.c.b16 %v3218, %v3217
        %v3269 = vpack.c.b16 %v3220, %v3219
        %v3270 = vpack.c.b16 %v3222, %v3221
        %v3271 = vpack.c.b16 %v3224, %v3223
        %v3272 = vpack.c.b16 %v3226, %v3225
        %v3273 = vpack.c.b16 %v3228, %v3227
        %v3274 = vpack.c.b16 %v3230, %v3229
        %v3275 = vpack.c.b16 %v3232, %v3231
        %v3276 = vpack.c.b16 %v3234, %v3233
        %v3277 = vpack.c.b16 %v3236, %v3235
        %v3278 = vpack.c.b16 %v3238, %v3237
        %v3279 = vpack.c.b16 %v3240, %v3239
        %v3280 = vpack.c.b16 %v3242, %v3241
        %v3281 = vpack.c.b16 %v3244, %v3243
        %v3282 = vpack.c.b16 %v3246, %v3245
        %v3283 = vpack.c.b16 %v3248, %v3247
        %v3284 = vpack.c.b16 %v3250, %v3249
        %v3285 = vpack.c.b16 %v3252, %v3251
        %v3286 = vpack.c.b16 %v3254, %v3253
        %3319 = vmatprep.subr.bf16.mxu0 0
        %3320 = vmatpush1.bf16.msra.mxu0 %v3255
        %3321 = vmatprep.subr.bf16.mxu0 0
        %3322 = vmatpush1.bf16.msra.mxu0 %v3256
        %3323 = vmatprep.subr.bf16.mxu0 0
        %3324 = vmatpush1.bf16.msra.mxu0 %v3257
        %3325 = vmatprep.subr.bf16.mxu0 0
        %3326 = vmatpush1.bf16.msra.mxu0 %v3258
        %3327 = vmatprep.subr.bf16.mxu0 0
        %3328 = vmatpush1.bf16.msra.mxu0 %v3259
        %3329 = vmatprep.subr.bf16.mxu0 0
        %3330 = vmatpush1.bf16.msra.mxu0 %v3260
        %3331 = vmatprep.subr.bf16.mxu0 0
        %3332 = vmatpush1.bf16.msra.mxu0 %v3261
        %3333 = vmatprep.subr.bf16.mxu0 0
        %3334 = vmatpush1.bf16.msra.mxu0 %v3262
        %3335 = vmatprep.subr.bf16.mxu0 0
        %3336 = vmatpush1.bf16.msra.mxu0 %v3263
        %3337 = vmatprep.subr.bf16.mxu0 0
        %3338 = vmatpush1.bf16.msra.mxu0 %v3264
        %3339 = vmatprep.subr.bf16.mxu0 0
        %3340 = vmatpush1.bf16.msra.mxu0 %v3265
        %3341 = vmatprep.subr.bf16.mxu0 0
        %3342 = vmatpush1.bf16.msra.mxu0 %v3266
        %3343 = vmatprep.subr.bf16.mxu0 0
        %3344 = vmatpush1.bf16.msra.mxu0 %v3267
        %3345 = vmatprep.subr.bf16.mxu0 0
        %3346 = vmatpush1.bf16.msra.mxu0 %v3268
        %3347 = vmatprep.subr.bf16.mxu0 0
        %3348 = vmatpush1.bf16.msra.mxu0 %v3269
        %3349 = vmatprep.subr.bf16.mxu0 0
        %3350 = vmatpush1.bf16.msra.mxu0 %v3270
        %3351 = vmatprep.mubr.bf16.mxu0 %v3059
        %3352 = vmatmul.mubr.bf16.gmra.mrb[0].mxu0 %v3058
        %v3353 = vpop.f32.mrb[0].mxu0
        %v3354 = vadd.f32 %v3126, %v3353
        %v3355 = vpop.f32.mrb[0].mxu0
        %v3356 = vpop.f32.mrb[0].mxu0
        %v3357 = vpop.f32.mrb[0].mxu0
        %3358 = vdwg.mxu0
        %3359 = vmatprep.subr.bf16.mxu0 0
        %3360 = vmatpush1.bf16.msra.mxu0 %v3271
        %3361 = vmatprep.subr.bf16.mxu0 0
        %3362 = vmatpush1.bf16.msra.mxu0 %v3272
        %3363 = vmatprep.subr.bf16.mxu0 0
        %3364 = vmatpush1.bf16.msra.mxu0 %v3273
        %3365 = vmatprep.subr.bf16.mxu0 0
        %3366 = vmatpush1.bf16.msra.mxu0 %v3274
        %3367 = vmatprep.subr.bf16.mxu0 0
        %3368 = vmatpush1.bf16.msra.mxu0 %v3275
        %3369 = vmatprep.subr.bf16.mxu0 0
        %3370 = vmatpush1.bf16.msra.mxu0 %v3276
        %3371 = vmatprep.subr.bf16.mxu0 0
        %3372 = vmatpush1.bf16.msra.mxu0 %v3277
        %3373 = vmatprep.subr.bf16.mxu0 0
        %3374 = vmatpush1.bf16.msra.mxu0 %v3278
        %3375 = vmatprep.subr.bf16.mxu0 0
        %3376 = vmatpush1.bf16.msra.mxu0 %v3279
        %3377 = vmatprep.subr.bf16.mxu0 0
        %3378 = vmatpush1.bf16.msra.mxu0 %v3280
        %3379 = vmatprep.subr.bf16.mxu0 0
        %3380 = vmatpush1.bf16.msra.mxu0 %v3281
        %3381 = vmatprep.subr.bf16.mxu0 0
        %3382 = vmatpush1.bf16.msra.mxu0 %v3282
        %3383 = vmatprep.subr.bf16.mxu0 0
        %3384 = vmatpush1.bf16.msra.mxu0 %v3283
        %3385 = vmatprep.subr.bf16.mxu0 0
        %3386 = vmatpush1.bf16.msra.mxu0 %v3284
        %3387 = vmatprep.subr.bf16.mxu0 0
        %3388 = vmatpush1.bf16.msra.mxu0 %v3285
        %3389 = vmatprep.subr.bf16.mxu0 0
        %3390 = vmatpush1.bf16.msra.mxu0 %v3286
        %3391 = vmatprep.mubr.bf16.mxu0 %v3061
        %3392 = vmatmul.mubr.bf16.gmra.mrb[0].mxu0 %v3060
        %v3393 = vpop.f32.mrb[0].mxu0
        %v3394 = vadd.f32 %v3354, %v3393
        %v3395 = vpop.f32.mrb[0].mxu0
        %v3396 = vpop.f32.mrb[0].mxu0
        %v3397 = vpop.f32.mrb[0].mxu0
        %3398 = vdwg.mxu0
        %vm3399 = vcmask 114688
        %3400 = vst.msk [vmem:[%s246] sm:$0x1] %vm3399, %v3394
      $region48: #{custom_detector_forward.1} parent=39 // pred_fallthru
        _
      %p3401 = scmp.lt.s32.totalorder %s20, 1
      %s3402 = scalar_select %p3401, %s20, 1
      %s3403 = scalar_lea.vmem %s5, %s3402
      // Predicated region
      $region49: #{custom_detector_forward.1} parent=39 // pred_check
        %p3404 = pneg %p158
      $region50: #{custom_detector_forward.1} parent=39 // pred_check_branch
        %3406 = sbr.rel (%p3404) target = $region52
      $region51: #{custom_detector_forward.1} parent=39 // pred_region
        _
      $region52: #{custom_detector_forward.1} parent=39 // pred_fallthru
        _
    $region40: #{custom_detector_forward.1} parent=5 // pred_fallthru
      _
    %p3407 = scmp.le.s32.totalorder 2, %s11
    // Predicated region
    $region53: #{custom_detector_forward.1} parent=5 // pred_check
      %p3408 = pneg %p3407
    $region54: #{custom_detector_forward.1} parent=5 // pred_check_branch
      %3410 = sbr.rel (%p3408) target = $region56
    $region55: #{custom_detector_forward.1} parent=5 // pred_region
      %s3411 = ssub.s32 %s11, 2
      // Predicated region
      $region57: #{custom_detector_forward.1} parent=55 // pred_check
        %p3412 = pneg %p164
      $region58: #{custom_detector_forward.1} parent=55 // pred_check_branch
        %3414 = sbr.rel (%p3412) target = $region60
      $region59: #{custom_detector_forward.1} parent=55 // pred_region
        %p3415 = scmp.lt.s32.totalorder %s22, 1
        %s3416 = scalar_select %p3415, %s22, 1
        %s3417 = scalar_lea.vmem %s5, %s3416
      $region60: #{custom_detector_forward.1} parent=55 // pred_fallthru
        _
    $region56: #{custom_detector_forward.1} parent=5 // pred_fallthru
      _
  $region6: #{custom_detector_forward.1} parent=0 // loop_footer
    %s15 = sadd.s32 1, %s11
  $region7: #{custom_detector_forward.1} parent=0 // loop_footer_branch
    %10 = sbr.rel target = $region3
  $region8: #{custom_detector_forward.1} parent=0 // loop_exit
    _

</llo_original>
